<compile_context>
chip_gen: v7x
topology: tpu7x:2x2x1
jax: 0.10.0
libtpu: 0.0.40
codegen_flags: <defaults>
</compile_context>

<pallas_src>
import functools
import math

import jax
import jax.numpy as jnp
from jax.experimental import pallas as pl
from jax.experimental.pallas import tpu as pltpu


def _round_up(a, b):
    return (a + b - 1) // b * b


_LEAKY_SLOPE = 0.01                      # nn.LeakyReLU() default
_VMEM_LIMIT = 32 * 1024 * 1024           # raises v5e's 16 MiB default

# (kh or kw) -> (phase, super-pixel offset) for the 2x2 phase-split input.
_PHASE = ((0, 0), (1, 0), (0, 1))


# ----------------------------------------------------------------------------
# Kernel 1: tiled fused  Y = act(X @ W + b)     (tail convs + EqualLinear)
# ----------------------------------------------------------------------------
def _matmul_bias_act_kernel(x_ref, w_ref, b_ref, o_ref, acc_ref, *, negative_slope):
    k = pl.program_id(2)

    @pl.when(k == 0)
    def _():
        acc_ref[...] = jnp.zeros_like(acc_ref)

    acc_ref[...] += jnp.dot(x_ref[...], w_ref[...],
                            preferred_element_type=jnp.float32)

    @pl.when(k == pl.num_programs(2) - 1)
    def _():
        y = acc_ref[...] + b_ref[...]
        if negative_slope is not None:
            y = jnp.where(y >= 0.0, y, negative_slope * y)
        o_ref[...] = y.astype(o_ref.dtype)


def matmul_bias_act(x, w, b, *, negative_slope=None, out_dtype=jnp.float32):
    """x: (M, K), w: (K, N) bf16, b: (1, N) f32 -> (M, N) out_dtype."""
    M, K = x.shape
    Kw, N = w.shape
    assert K == Kw, (K, Kw)
    if x.dtype != jnp.bfloat16:
        x = x.astype(jnp.bfloat16)
    if w.dtype != jnp.bfloat16:
        w = w.astype(jnp.bfloat16)
    b = b.astype(jnp.float32)

    # MXU-friendly, lane-dense tiles clamped to the (padded) problem size.
    tm = min(256, _round_up(M, 8))
    tn = min(256, _round_up(N, 128))
    tk = min(512, _round_up(K, 128))
    Mp, Np, Kp = _round_up(M, tm), _round_up(N, tn), _round_up(K, tk)
    if (Mp, Kp) != (M, K):
        x = jnp.pad(x, ((0, Mp - M), (0, Kp - K)))
    if (Kp, Np) != (K, N):
        w = jnp.pad(w, ((0, Kp - K), (0, Np - N)))
    if Np != N:
        b = jnp.pad(b, ((0, 0), (0, Np - N)))

    grid = (Mp // tm, Np // tn, Kp // tk)
    kernel = functools.partial(_matmul_bias_act_kernel,
                               negative_slope=negative_slope)
    out = pl.pallas_call(
        kernel,
        out_shape=jax.ShapeDtypeStruct((Mp, Np), out_dtype),
        grid=grid,
        in_specs=[
            pl.BlockSpec((tm, tk), lambda i, j, k: (i, k)),
            pl.BlockSpec((tk, tn), lambda i, j, k: (k, j)),
            pl.BlockSpec((1, tn), lambda i, j, k: (0, j)),
        ],
        out_specs=pl.BlockSpec((tm, tn), lambda i, j, k: (i, j)),
        scratch_shapes=[pltpu.VMEM((tm, tn), jnp.float32)],
        compiler_params=pltpu.CompilerParams(
            dimension_semantics=("parallel", "parallel", "arbitrary"),
            vmem_limit_bytes=_VMEM_LIMIT),
        cost_estimate=pl.CostEstimate(
            flops=2 * Mp * Np * Kp,
            transcendentals=0,
            bytes_accessed=2 * (Mp * Kp + Kp * Np)
                           + Mp * Np * jnp.dtype(out_dtype).itemsize),
    )(x, w, b)
    if (Mp, Np) != (M, N):
        out = out[:M, :N]
    return out


# ----------------------------------------------------------------------------
# Kernel 2: fused Conv2d(3x3, stride=2, pad=1) + bias + LeakyReLU
#           (in-kernel 9-tap gather; no 9x HBM im2col)
# ----------------------------------------------------------------------------
def _conv3x3s2_kernel(x_ref, w_ref, b_ref, o_ref, acc_ref, *, ho, wo,
                      negative_slope):
    # x_ref: (1, 2, 2, ho+1, wo+1, cin) f32 phase-split padded image
    # w_ref: (9, cin, ct) bf16 (tap-major); b_ref: (1, ct) f32
    # o_ref: (1, ho*wo, ct); acc_ref: (ho*wo, ct) f32
    cin = x_ref.shape[-1]
    acc_ref[...] = jnp.zeros_like(acc_ref)
    t = 0
    for kh in range(3):
        ph, ah = _PHASE[kh]
        for kw in range(3):
            qw, aw = _PHASE[kw]
            tap = x_ref[0, ph, qw, ah:ah + ho, aw:aw + wo, :]    # (ho, wo, cin)
            lhs = tap.reshape(ho * wo, cin).astype(jnp.bfloat16)
            acc_ref[...] += jnp.dot(lhs, w_ref[t],
                                    preferred_element_type=jnp.float32)
            t += 1
    y = acc_ref[...] + b_ref[...]
    y = jnp.where(y >= 0.0, y, negative_slope * y)
    o_ref[0] = y.astype(o_ref.dtype)


def conv3x3s2_fused(x_nhwc, w9, b, *, negative_slope=_LEAKY_SLOPE):
    """x: (N,H,W,Cin) f32, w9: (9,Cin,Cout) bf16, b: (1,Cout) f32
       -> (N, H//2, W//2, Cout) bf16."""
    N, H, W, C = x_nhwc.shape
    Ho, Wo = H // 2, W // 2
    cout = w9.shape[-1]
    m = Ho * Wo

    # Cheap 1x rearrangement (pad + free reshape + transpose). The 9-tap
    # im2col gather itself happens inside the kernel.
    xp = jnp.pad(x_nhwc.astype(jnp.float32), ((0, 0), (1, 1), (1, 1), (0, 0)))
    xp = xp.reshape(N, Ho + 1, 2, Wo + 1, 2, C)
    xp = jnp.transpose(xp, (0, 2, 4, 1, 3, 5))     # (N, 2, 2, Ho+1, Wo+1, C)

    tn = 256 if cout % 256 == 0 else cout
    grid = (N, cout // tn)
    kernel = functools.partial(_conv3x3s2_kernel, ho=Ho, wo=Wo,
                               negative_slope=negative_slope)
    out = pl.pallas_call(
        kernel,
        out_shape=jax.ShapeDtypeStruct((N, m, cout), jnp.bfloat16),
        grid=grid,
        in_specs=[
            pl.BlockSpec((1, 2, 2, Ho + 1, Wo + 1, C),
                         lambda n, j: (n, 0, 0, 0, 0, 0)),
            pl.BlockSpec((9, C, tn), lambda n, j: (0, 0, j)),
            pl.BlockSpec((1, tn), lambda n, j: (0, j)),
        ],
        out_specs=pl.BlockSpec((1, m, tn), lambda n, j: (n, 0, j)),
        scratch_shapes=[pltpu.VMEM((m, tn), jnp.float32)],
        compiler_params=pltpu.CompilerParams(
            dimension_semantics=("parallel", "parallel"),
            vmem_limit_bytes=_VMEM_LIMIT),
        cost_estimate=pl.CostEstimate(
            flops=2 * N * m * 9 * C * cout,
            transcendentals=0,
            bytes_accessed=xp.size * 4 + w9.size * 2 * (cout // tn)
                           + N * m * cout * 2),
    )(xp, w9.astype(jnp.bfloat16), b.astype(jnp.float32))
    return out.reshape(N, Ho, Wo, cout)


# ----------------------------------------------------------------------------
# Fallback glue for the tiny tail layers: im2col (negligible data at 4x4/2x2)
# ----------------------------------------------------------------------------
def _im2col_3x3_s2_p1(x_nhwc):
    """x: (N,H,W,C) -> (N*Ho*Wo, 9*C), taps ordered (kh, kw, c)."""
    N, H, W, C = x_nhwc.shape
    Ho = (H - 1) // 2 + 1
    Wo = (W - 1) // 2 + 1
    xp = jnp.pad(x_nhwc, ((0, 0), (1, 1), (1, 1), (0, 0)))
    cols = []
    for kh in range(3):
        for kw in range(3):
            patch = jax.lax.slice(
                xp,
                (0, kh, kw, 0),
                (N, kh + 2 * (Ho - 1) + 1, kw + 2 * (Wo - 1) + 1, C),
                (1, 2, 2, 1))
            cols.append(patch)
    cols = jnp.stack(cols, axis=3)                  # (N, Ho, Wo, 9, C)
    return cols.reshape(N * Ho * Wo, 9 * C), (N, Ho, Wo)


# ----------------------------------------------------------------------------
# Parameters (deterministic synthetic init, shapes matching the module).
# Weights are stored pre-transposed + bf16, biases as (1, N) f32 (hoisted).
# ----------------------------------------------------------------------------
def init_params(key, in_c, out_c, spatial):
    num_pools = int(math.log2(spatial))
    params = {}
    cin = in_c
    for layer in range(num_pools):
        key, kw_key, kb_key = jax.random.split(key, 3)
        # PyTorch Conv2d weight (out_c, cin, 3, 3) -> (kh, kw, cin, out_c)
        w = jax.random.normal(kw_key, (out_c, cin, 3, 3), jnp.float32) * 0.1
        w9 = jnp.transpose(w, (2, 3, 1, 0)).reshape(9, cin, out_c)
        b = jax.random.normal(kb_key, (out_c,), jnp.float32) * 0.01
        params[f"conv{layer}_w"] = w9.astype(jnp.bfloat16)
        params[f"conv{layer}_b"] = b.reshape(1, out_c).astype(jnp.float32)
        cin = out_c
    # EqualLinear(out_c, out_c, lr_mul=1): y = x @ (W*scale).T + bias*lr_mul
    key, kl_key = jax.random.split(key)
    lr_mul = 1.0
    lin_w = jax.random.normal(kl_key, (out_c, out_c), jnp.float32) / lr_mul
    scale = (1.0 / math.sqrt(out_c)) * lr_mul
    params["lin_w"] = ((lin_w * scale).T).astype(jnp.bfloat16)   # (in, out)
    params["lin_b"] = (jnp.zeros((1, out_c), jnp.float32) * lr_mul)
    return params


# ----------------------------------------------------------------------------
# Forward pass (semantics of GradualStyleBlock.forward)
# ----------------------------------------------------------------------------
def gradual_style_block_forward(x_nchw, params, *, out_c, spatial):
    num_pools = int(math.log2(spatial))
    x = jnp.transpose(x_nchw, (0, 2, 3, 1))          # NCHW -> NHWC (lane-dense)
    for layer in range(num_pools):
        w9 = params[f"conv{layer}_w"]                # (9, cin, out_c) bf16
        b = params[f"conv{layer}_b"]                 # (1, out_c) f32
        N, H, W, C = x.shape
        if (W // 2) % 8 == 0:
            # Large layer: fused in-kernel 9-tap conv (no HBM im2col).
            x = conv3x3s2_fused(x, w9, b, negative_slope=_LEAKY_SLOPE)
        else:
            # Tiny tail layer: im2col + tiled fused matmul.
            cols, (n, ho, wo) = _im2col_3x3_s2_p1(x.astype(jnp.bfloat16))
            y = matmul_bias_act(cols, w9.reshape(9 * C, out_c), b,
                                negative_slope=_LEAKY_SLOPE,
                                out_dtype=jnp.bfloat16)
            x = y.reshape(n, ho, wo, out_c)
    feat = x.reshape(-1, out_c)                      # spatial is 1x1 here
    out = matmul_bias_act(feat, params["lin_w"], params["lin_b"],
                          negative_slope=None, out_dtype=jnp.float32)
    return out


# ----------------------------------------------------------------------------
if __name__ == "__main__":
    IN_C, OUT_C, SPATIAL, BATCH = 4, 8, 16, 2

    key = jax.random.PRNGKey(0)
    key, xk, pk = jax.random.split(key, 3)
    x = jax.random.normal(xk, (BATCH, IN_C, SPATIAL, SPATIAL), jnp.float32)
    params = init_params(pk, IN_C, OUT_C, SPATIAL)

    fwd = jax.jit(functools.partial(gradual_style_block_forward,
                                    out_c=OUT_C, spatial=SPATIAL))
    out = fwd(x, params)
    jax.block_until_ready(out)
    assert out.shape == (BATCH, OUT_C), out.shape
    print("KERNEL_OK")
</pallas_src>

<mosaic_0001>
module attributes {stable_mosaic.version = 11 : i64} {
  func.func @_conv3x3s2_kernel(%arg0: i32, %arg1: i32, %arg2: memref<1x2x2x9x9x4xf32, #tpu.memory_space<vmem>>, %arg3: memref<9x4x8xbf16, #tpu.memory_space<vmem>>, %arg4: memref<1x8xf32, #tpu.memory_space<vmem>>, %arg5: memref<1x64x8xbf16, #tpu.memory_space<vmem>>, %arg6: memref<64x8xf32, #tpu.memory_space<vmem>>) attributes {dimension_semantics = [#tpu.dimension_semantics<parallel>, #tpu.dimension_semantics<parallel>], iteration_bounds = array<i64: 2, 1>, scalar_prefetch = 0 : i64, scratch_operands = 1 : i64, tpu.core_type = #tpu.core_type<tc>, window_params = [{transform_indices = @transform_0, window_bounds = array<i64: 1, 2, 2, 9, 9, 4>}, {transform_indices = @transform_1, window_bounds = array<i64: 9, 4, 8>}, {transform_indices = @transform_2, window_bounds = array<i64: 1, 8>}, {transform_indices = @transform_3, window_bounds = array<i64: 1, 64, 8>}]} {
    %cst = arith.constant 0.000000e+00 : f32
    %0 = vector.broadcast %cst : f32 to vector<64x8xf32>
    %c0 = arith.constant 0 : index
    %c0_0 = arith.constant 0 : index
    %1 = vector.load %arg6[%c0, %c0_0] : memref<64x8xf32, #tpu.memory_space<vmem>>, vector<64x8xf32>
    tpu.vector_store %arg6[%c0, %c0_0], %0 {strides = array<i32>} : memref<64x8xf32, #tpu.memory_space<vmem>>, vector<64x8xf32>,
    %c0_1 = arith.constant 0 : index
    %c0_2 = arith.constant 0 : index
    %c0_3 = arith.constant 0 : index
    %c0_4 = arith.constant 0 : index
    %c0_5 = arith.constant 0 : index
    %c0_6 = arith.constant 0 : index
    %2 = vector.load %arg2[%c0_1, %c0_2, %c0_3, %c0_4, %c0_5, %c0_6] : memref<1x2x2x9x9x4xf32, #tpu.memory_space<vmem>>, vector<1x1x1x8x8x4xf32>
    %3 = vector.shape_cast %2 : vector<1x1x1x8x8x4xf32> to vector<8x8x4xf32>
    %4 = vector.shape_cast %3 : vector<8x8x4xf32> to vector<64x4xf32>
    %5 = arith.truncf %4 : vector<64x4xf32> to vector<64x4xbf16>
    %c0_7 = arith.constant 0 : index
    %c0_8 = arith.constant 0 : index
    %6 = vector.load %arg6[%c0_7, %c0_8] : memref<64x8xf32, #tpu.memory_space<vmem>>, vector<64x8xf32>
    %c0_9 = arith.constant 0 : index
    %c0_10 = arith.constant 0 : index
    %c0_11 = arith.constant 0 : index
    %7 = vector.load %arg3[%c0_9, %c0_10, %c0_11] : memref<9x4x8xbf16, #tpu.memory_space<vmem>>, vector<1x4x8xbf16>
    %8 = vector.shape_cast %7 : vector<1x4x8xbf16> to vector<4x8xbf16>
    %cst_12 = arith.constant dense<0.000000e+00> : vector<64x8xf32>
    %9 = tpu.matmul %5, %8, %cst_12 {dimension_numbers = #tpu.dot_dimension_numbers<[1], [0], [0], [1], [0, 0, 1, 1], [], []>} : vector<64x4xbf16>, vector<4x8xbf16>, vector<64x8xf32> -> vector<64x8xf32>
    %10 = arith.addf %6, %9 : vector<64x8xf32>
    %c0_13 = arith.constant 0 : index
    %c0_14 = arith.constant 0 : index
    %11 = vector.load %arg6[%c0_13, %c0_14] : memref<64x8xf32, #tpu.memory_space<vmem>>, vector<64x8xf32>
    tpu.vector_store %arg6[%c0_13, %c0_14], %10 {strides = array<i32>} : memref<64x8xf32, #tpu.memory_space<vmem>>, vector<64x8xf32>,
    %c0_15 = arith.constant 0 : index
    %c0_16 = arith.constant 0 : index
    %c1 = arith.constant 1 : index
    %c0_17 = arith.constant 0 : index
    %c0_18 = arith.constant 0 : index
    %c0_19 = arith.constant 0 : index
    %12 = vector.load %arg2[%c0_15, %c0_16, %c1, %c0_17, %c0_18, %c0_19] : memref<1x2x2x9x9x4xf32, #tpu.memory_space<vmem>>, vector<1x1x1x8x8x4xf32>
    %13 = vector.shape_cast %12 : vector<1x1x1x8x8x4xf32> to vector<8x8x4xf32>
    %14 = vector.shape_cast %13 : vector<8x8x4xf32> to vector<64x4xf32>
    %15 = arith.truncf %14 : vector<64x4xf32> to vector<64x4xbf16>
    %c0_20 = arith.constant 0 : index
    %c0_21 = arith.constant 0 : index
    %16 = vector.load %arg6[%c0_20, %c0_21] : memref<64x8xf32, #tpu.memory_space<vmem>>, vector<64x8xf32>
    %c1_22 = arith.constant 1 : index
    %c0_23 = arith.constant 0 : index
    %c0_24 = arith.constant 0 : index
    %17 = vector.load %arg3[%c1_22, %c0_23, %c0_24] : memref<9x4x8xbf16, #tpu.memory_space<vmem>>, vector<1x4x8xbf16>
    %18 = vector.shape_cast %17 : vector<1x4x8xbf16> to vector<4x8xbf16>
    %cst_25 = arith.constant dense<0.000000e+00> : vector<64x8xf32>
    %19 = tpu.matmul %15, %18, %cst_25 {dimension_numbers = #tpu.dot_dimension_numbers<[1], [0], [0], [1], [0, 0, 1, 1], [], []>} : vector<64x4xbf16>, vector<4x8xbf16>, vector<64x8xf32> -> vector<64x8xf32>
    %20 = arith.addf %16, %19 : vector<64x8xf32>
    %c0_26 = arith.constant 0 : index
    %c0_27 = arith.constant 0 : index
    %21 = vector.load %arg6[%c0_26, %c0_27] : memref<64x8xf32, #tpu.memory_space<vmem>>, vector<64x8xf32>
    tpu.vector_store %arg6[%c0_26, %c0_27], %20 {strides = array<i32>} : memref<64x8xf32, #tpu.memory_space<vmem>>, vector<64x8xf32>,
    %c0_28 = arith.constant 0 : index
    %c0_29 = arith.constant 0 : index
    %c0_30 = arith.constant 0 : index
    %c0_31 = arith.constant 0 : index
    %c1_32 = arith.constant 1 : index
    %c0_33 = arith.constant 0 : index
    %22 = vector.load %arg2[%c0_28, %c0_29, %c0_30, %c0_31, %c1_32, %c0_33] : memref<1x2x2x9x9x4xf32, #tpu.memory_space<vmem>>, vector<1x1x1x8x8x4xf32>
    %23 = vector.shape_cast %22 : vector<1x1x1x8x8x4xf32> to vector<8x8x4xf32>
    %24 = vector.shape_cast %23 : vector<8x8x4xf32> to vector<64x4xf32>
    %25 = arith.truncf %24 : vector<64x4xf32> to vector<64x4xbf16>
    %c0_34 = arith.constant 0 : index
    %c0_35 = arith.constant 0 : index
    %26 = vector.load %arg6[%c0_34, %c0_35] : memref<64x8xf32, #tpu.memory_space<vmem>>, vector<64x8xf32>
    %c2 = arith.constant 2 : index
    %c0_36 = arith.constant 0 : index
    %c0_37 = arith.constant 0 : index
    %27 = vector.load %arg3[%c2, %c0_36, %c0_37] : memref<9x4x8xbf16, #tpu.memory_space<vmem>>, vector<1x4x8xbf16>
    %28 = vector.shape_cast %27 : vector<1x4x8xbf16> to vector<4x8xbf16>
    %cst_38 = arith.constant dense<0.000000e+00> : vector<64x8xf32>
    %29 = tpu.matmul %25, %28, %cst_38 {dimension_numbers = #tpu.dot_dimension_numbers<[1], [0], [0], [1], [0, 0, 1, 1], [], []>} : vector<64x4xbf16>, vector<4x8xbf16>, vector<64x8xf32> -> vector<64x8xf32>
    %30 = arith.addf %26, %29 : vector<64x8xf32>
    %c0_39 = arith.constant 0 : index
    %c0_40 = arith.constant 0 : index
    %31 = vector.load %arg6[%c0_39, %c0_40] : memref<64x8xf32, #tpu.memory_space<vmem>>, vector<64x8xf32>
    tpu.vector_store %arg6[%c0_39, %c0_40], %30 {strides = array<i32>} : memref<64x8xf32, #tpu.memory_space<vmem>>, vector<64x8xf32>,
    %c0_41 = arith.constant 0 : index
    %c1_42 = arith.constant 1 : index
    %c0_43 = arith.constant 0 : index
    %c0_44 = arith.constant 0 : index
    %c0_45 = arith.constant 0 : index
    %c0_46 = arith.constant 0 : index
    %32 = vector.load %arg2[%c0_41, %c1_42, %c0_43, %c0_44, %c0_45, %c0_46] : memref<1x2x2x9x9x4xf32, #tpu.memory_space<vmem>>, vector<1x1x1x8x8x4xf32>
    %33 = vector.shape_cast %32 : vector<1x1x1x8x8x4xf32> to vector<8x8x4xf32>
    %34 = vector.shape_cast %33 : vector<8x8x4xf32> to vector<64x4xf32>
    %35 = arith.truncf %34 : vector<64x4xf32> to vector<64x4xbf16>
    %c0_47 = arith.constant 0 : index
    %c0_48 = arith.constant 0 : index
    %36 = vector.load %arg6[%c0_47, %c0_48] : memref<64x8xf32, #tpu.memory_space<vmem>>, vector<64x8xf32>
    %c3 = arith.constant 3 : index
    %c0_49 = arith.constant 0 : index
    %c0_50 = arith.constant 0 : index
    %37 = vector.load %arg3[%c3, %c0_49, %c0_50] : memref<9x4x8xbf16, #tpu.memory_space<vmem>>, vector<1x4x8xbf16>
    %38 = vector.shape_cast %37 : vector<1x4x8xbf16> to vector<4x8xbf16>
    %cst_51 = arith.constant dense<0.000000e+00> : vector<64x8xf32>
    %39 = tpu.matmul %35, %38, %cst_51 {dimension_numbers = #tpu.dot_dimension_numbers<[1], [0], [0], [1], [0, 0, 1, 1], [], []>} : vector<64x4xbf16>, vector<4x8xbf16>, vector<64x8xf32> -> vector<64x8xf32>
    %40 = arith.addf %36, %39 : vector<64x8xf32>
    %c0_52 = arith.constant 0 : index
    %c0_53 = arith.constant 0 : index
    %41 = vector.load %arg6[%c0_52, %c0_53] : memref<64x8xf32, #tpu.memory_space<vmem>>, vector<64x8xf32>
    tpu.vector_store %arg6[%c0_52, %c0_53], %40 {strides = array<i32>} : memref<64x8xf32, #tpu.memory_space<vmem>>, vector<64x8xf32>,
    %c0_54 = arith.constant 0 : index
    %c1_55 = arith.constant 1 : index
    %c1_56 = arith.constant 1 : index
    %c0_57 = arith.constant 0 : index
    %c0_58 = arith.constant 0 : index
    %c0_59 = arith.constant 0 : index
    %42 = vector.load %arg2[%c0_54, %c1_55, %c1_56, %c0_57, %c0_58, %c0_59] : memref<1x2x2x9x9x4xf32, #tpu.memory_space<vmem>>, vector<1x1x1x8x8x4xf32>
    %43 = vector.shape_cast %42 : vector<1x1x1x8x8x4xf32> to vector<8x8x4xf32>
    %44 = vector.shape_cast %43 : vector<8x8x4xf32> to vector<64x4xf32>
    %45 = arith.truncf %44 : vector<64x4xf32> to vector<64x4xbf16>
    %c0_60 = arith.constant 0 : index
    %c0_61 = arith.constant 0 : index
    %46 = vector.load %arg6[%c0_60, %c0_61] : memref<64x8xf32, #tpu.memory_space<vmem>>, vector<64x8xf32>
    %c4 = arith.constant 4 : index
    %c0_62 = arith.constant 0 : index
    %c0_63 = arith.constant 0 : index
    %47 = vector.load %arg3[%c4, %c0_62, %c0_63] : memref<9x4x8xbf16, #tpu.memory_space<vmem>>, vector<1x4x8xbf16>
    %48 = vector.shape_cast %47 : vector<1x4x8xbf16> to vector<4x8xbf16>
    %cst_64 = arith.constant dense<0.000000e+00> : vector<64x8xf32>
    %49 = tpu.matmul %45, %48, %cst_64 {dimension_numbers = #tpu.dot_dimension_numbers<[1], [0], [0], [1], [0, 0, 1, 1], [], []>} : vector<64x4xbf16>, vector<4x8xbf16>, vector<64x8xf32> -> vector<64x8xf32>
    %50 = arith.addf %46, %49 : vector<64x8xf32>
    %c0_65 = arith.constant 0 : index
    %c0_66 = arith.constant 0 : index
    %51 = vector.load %arg6[%c0_65, %c0_66] : memref<64x8xf32, #tpu.memory_space<vmem>>, vector<64x8xf32>
    tpu.vector_store %arg6[%c0_65, %c0_66], %50 {strides = array<i32>} : memref<64x8xf32, #tpu.memory_space<vmem>>, vector<64x8xf32>,
    %c0_67 = arith.constant 0 : index
    %c1_68 = arith.constant 1 : index
    %c0_69 = arith.constant 0 : index
    %c0_70 = arith.constant 0 : index
    %c1_71 = arith.constant 1 : index
    %c0_72 = arith.constant 0 : index
    %52 = vector.load %arg2[%c0_67, %c1_68, %c0_69, %c0_70, %c1_71, %c0_72] : memref<1x2x2x9x9x4xf32, #tpu.memory_space<vmem>>, vector<1x1x1x8x8x4xf32>
    %53 = vector.shape_cast %52 : vector<1x1x1x8x8x4xf32> to vector<8x8x4xf32>
    %54 = vector.shape_cast %53 : vector<8x8x4xf32> to vector<64x4xf32>
    %55 = arith.truncf %54 : vector<64x4xf32> to vector<64x4xbf16>
    %c0_73 = arith.constant 0 : index
    %c0_74 = arith.constant 0 : index
    %56 = vector.load %arg6[%c0_73, %c0_74] : memref<64x8xf32, #tpu.memory_space<vmem>>, vector<64x8xf32>
    %c5 = arith.constant 5 : index
    %c0_75 = arith.constant 0 : index
    %c0_76 = arith.constant 0 : index
    %57 = vector.load %arg3[%c5, %c0_75, %c0_76] : memref<9x4x8xbf16, #tpu.memory_space<vmem>>, vector<1x4x8xbf16>
    %58 = vector.shape_cast %57 : vector<1x4x8xbf16> to vector<4x8xbf16>
    %cst_77 = arith.constant dense<0.000000e+00> : vector<64x8xf32>
    %59 = tpu.matmul %55, %58, %cst_77 {dimension_numbers = #tpu.dot_dimension_numbers<[1], [0], [0], [1], [0, 0, 1, 1], [], []>} : vector<64x4xbf16>, vector<4x8xbf16>, vector<64x8xf32> -> vector<64x8xf32>
    %60 = arith.addf %56, %59 : vector<64x8xf32>
    %c0_78 = arith.constant 0 : index
    %c0_79 = arith.constant 0 : index
    %61 = vector.load %arg6[%c0_78, %c0_79] : memref<64x8xf32, #tpu.memory_space<vmem>>, vector<64x8xf32>
    tpu.vector_store %arg6[%c0_78, %c0_79], %60 {strides = array<i32>} : memref<64x8xf32, #tpu.memory_space<vmem>>, vector<64x8xf32>,
    %c0_80 = arith.constant 0 : index
    %c0_81 = arith.constant 0 : index
    %c0_82 = arith.constant 0 : index
    %c1_83 = arith.constant 1 : index
    %c0_84 = arith.constant 0 : index
    %c0_85 = arith.constant 0 : index
    %62 = vector.load %arg2[%c0_80, %c0_81, %c0_82, %c1_83, %c0_84, %c0_85] : memref<1x2x2x9x9x4xf32, #tpu.memory_space<vmem>>, vector<1x1x1x8x8x4xf32>
    %63 = vector.shape_cast %62 : vector<1x1x1x8x8x4xf32> to vector<8x8x4xf32>
    %64 = vector.shape_cast %63 : vector<8x8x4xf32> to vector<64x4xf32>
    %65 = arith.truncf %64 : vector<64x4xf32> to vector<64x4xbf16>
    %c0_86 = arith.constant 0 : index
    %c0_87 = arith.constant 0 : index
    %66 = vector.load %arg6[%c0_86, %c0_87] : memref<64x8xf32, #tpu.memory_space<vmem>>, vector<64x8xf32>
    %c6 = arith.constant 6 : index
    %c0_88 = arith.constant 0 : index
    %c0_89 = arith.constant 0 : index
    %67 = vector.load %arg3[%c6, %c0_88, %c0_89] : memref<9x4x8xbf16, #tpu.memory_space<vmem>>, vector<1x4x8xbf16>
    %68 = vector.shape_cast %67 : vector<1x4x8xbf16> to vector<4x8xbf16>
    %cst_90 = arith.constant dense<0.000000e+00> : vector<64x8xf32>
    %69 = tpu.matmul %65, %68, %cst_90 {dimension_numbers = #tpu.dot_dimension_numbers<[1], [0], [0], [1], [0, 0, 1, 1], [], []>} : vector<64x4xbf16>, vector<4x8xbf16>, vector<64x8xf32> -> vector<64x8xf32>
    %70 = arith.addf %66, %69 : vector<64x8xf32>
    %c0_91 = arith.constant 0 : index
    %c0_92 = arith.constant 0 : index
    %71 = vector.load %arg6[%c0_91, %c0_92] : memref<64x8xf32, #tpu.memory_space<vmem>>, vector<64x8xf32>
    tpu.vector_store %arg6[%c0_91, %c0_92], %70 {strides = array<i32>} : memref<64x8xf32, #tpu.memory_space<vmem>>, vector<64x8xf32>,
    %c0_93 = arith.constant 0 : index
    %c0_94 = arith.constant 0 : index
    %c1_95 = arith.constant 1 : index
    %c1_96 = arith.constant 1 : index
    %c0_97 = arith.constant 0 : index
    %c0_98 = arith.constant 0 : index
    %72 = vector.load %arg2[%c0_93, %c0_94, %c1_95, %c1_96, %c0_97, %c0_98] : memref<1x2x2x9x9x4xf32, #tpu.memory_space<vmem>>, vector<1x1x1x8x8x4xf32>
    %73 = vector.shape_cast %72 : vector<1x1x1x8x8x4xf32> to vector<8x8x4xf32>
    %74 = vector.shape_cast %73 : vector<8x8x4xf32> to vector<64x4xf32>
    %75 = arith.truncf %74 : vector<64x4xf32> to vector<64x4xbf16>
    %c0_99 = arith.constant 0 : index
    %c0_100 = arith.constant 0 : index
    %76 = vector.load %arg6[%c0_99, %c0_100] : memref<64x8xf32, #tpu.memory_space<vmem>>, vector<64x8xf32>
    %c7 = arith.constant 7 : index
    %c0_101 = arith.constant 0 : index
    %c0_102 = arith.constant 0 : index
    %77 = vector.load %arg3[%c7, %c0_101, %c0_102] : memref<9x4x8xbf16, #tpu.memory_space<vmem>>, vector<1x4x8xbf16>
    %78 = vector.shape_cast %77 : vector<1x4x8xbf16> to vector<4x8xbf16>
    %cst_103 = arith.constant dense<0.000000e+00> : vector<64x8xf32>
    %79 = tpu.matmul %75, %78, %cst_103 {dimension_numbers = #tpu.dot_dimension_numbers<[1], [0], [0], [1], [0, 0, 1, 1], [], []>} : vector<64x4xbf16>, vector<4x8xbf16>, vector<64x8xf32> -> vector<64x8xf32>
    %80 = arith.addf %76, %79 : vector<64x8xf32>
    %c0_104 = arith.constant 0 : index
    %c0_105 = arith.constant 0 : index
    %81 = vector.load %arg6[%c0_104, %c0_105] : memref<64x8xf32, #tpu.memory_space<vmem>>, vector<64x8xf32>
    tpu.vector_store %arg6[%c0_104, %c0_105], %80 {strides = array<i32>} : memref<64x8xf32, #tpu.memory_space<vmem>>, vector<64x8xf32>,
    %c0_106 = arith.constant 0 : index
    %c0_107 = arith.constant 0 : index
    %c0_108 = arith.constant 0 : index
    %c1_109 = arith.constant 1 : index
    %c1_110 = arith.constant 1 : index
    %c0_111 = arith.constant 0 : index
    %82 = vector.load %arg2[%c0_106, %c0_107, %c0_108, %c1_109, %c1_110, %c0_111] : memref<1x2x2x9x9x4xf32, #tpu.memory_space<vmem>>, vector<1x1x1x8x8x4xf32>
    %83 = vector.shape_cast %82 : vector<1x1x1x8x8x4xf32> to vector<8x8x4xf32>
    %84 = vector.shape_cast %83 : vector<8x8x4xf32> to vector<64x4xf32>
    %85 = arith.truncf %84 : vector<64x4xf32> to vector<64x4xbf16>
    %c0_112 = arith.constant 0 : index
    %c0_113 = arith.constant 0 : index
    %86 = vector.load %arg6[%c0_112, %c0_113] : memref<64x8xf32, #tpu.memory_space<vmem>>, vector<64x8xf32>
    %c8 = arith.constant 8 : index
    %c0_114 = arith.constant 0 : index
    %c0_115 = arith.constant 0 : index
    %87 = vector.load %arg3[%c8, %c0_114, %c0_115] : memref<9x4x8xbf16, #tpu.memory_space<vmem>>, vector<1x4x8xbf16>
    %88 = vector.shape_cast %87 : vector<1x4x8xbf16> to vector<4x8xbf16>
    %cst_116 = arith.constant dense<0.000000e+00> : vector<64x8xf32>
    %89 = tpu.matmul %85, %88, %cst_116 {dimension_numbers = #tpu.dot_dimension_numbers<[1], [0], [0], [1], [0, 0, 1, 1], [], []>} : vector<64x4xbf16>, vector<4x8xbf16>, vector<64x8xf32> -> vector<64x8xf32>
    %90 = arith.addf %86, %89 : vector<64x8xf32>
    %c0_117 = arith.constant 0 : index
    %c0_118 = arith.constant 0 : index
    %91 = vector.load %arg6[%c0_117, %c0_118] : memref<64x8xf32, #tpu.memory_space<vmem>>, vector<64x8xf32>
    tpu.vector_store %arg6[%c0_117, %c0_118], %90 {strides = array<i32>} : memref<64x8xf32, #tpu.memory_space<vmem>>, vector<64x8xf32>,
    %c0_119 = arith.constant 0 : index
    %c0_120 = arith.constant 0 : index
    %92 = vector.load %arg6[%c0_119, %c0_120] : memref<64x8xf32, #tpu.memory_space<vmem>>, vector<64x8xf32>
    %c0_121 = arith.constant 0 : index
    %c0_122 = arith.constant 0 : index
    %93 = vector.load %arg4[%c0_121, %c0_122] : memref<1x8xf32, #tpu.memory_space<vmem>>, vector<1x8xf32>
    %94 = vector.broadcast %93 : vector<1x8xf32> to vector<64x8xf32>
    %95 = arith.addf %92, %94 : vector<64x8xf32>
    %cst_123 = arith.constant 0.000000e+00 : f32
    %96 = vector.broadcast %cst_123 : f32 to vector<64x8xf32>
    %97 = arith.cmpf oge, %95, %96 : vector<64x8xf32>
    %cst_124 = arith.constant 0.00999999977 : f32
    %98 = vector.broadcast %cst_124 : f32 to vector<64x8xf32>
    %99 = arith.mulf %98, %95 : vector<64x8xf32>
    %100 = arith.select %97, %95, %99 : vector<64x8xi1>, vector<64x8xf32>
    %101 = arith.truncf %100 : vector<64x8xf32> to vector<64x8xbf16>
    %c0_125 = arith.constant 0 : index
    %c0_126 = arith.constant 0 : index
    %c0_127 = arith.constant 0 : index
    %102 = vector.load %arg5[%c0_125, %c0_126, %c0_127] : memref<1x64x8xbf16, #tpu.memory_space<vmem>>, vector<1x64x8xbf16>
    %103 = vector.shape_cast %102 : vector<1x64x8xbf16> to vector<64x8xbf16>
    %104 = vector.shape_cast %101 : vector<64x8xbf16> to vector<1x64x8xbf16>
    tpu.vector_store %arg5[%c0_125, %c0_126, %c0_127], %104 {strides = array<i32>} : memref<1x64x8xbf16, #tpu.memory_space<vmem>>, vector<1x64x8xbf16>,
    return
  }
  func.func @transform_0(%arg0: i32, %arg1: i32) -> (i32, i32, i32, i32, i32, i32) {
    %c0_i32 = arith.constant 0 : i32
    %c0_i32_0 = arith.constant 0 : i32
    %c0_i32_1 = arith.constant 0 : i32
    %c0_i32_2 = arith.constant 0 : i32
    %c0_i32_3 = arith.constant 0 : i32
    %c0_i32_4 = arith.constant 0 : i32
    return %arg0, %c0_i32, %c0_i32_0, %c0_i32_1, %c0_i32_2, %c0_i32_3 : i32, i32, i32, i32, i32, i32
  }
  func.func @transform_1(%arg0: i32, %arg1: i32) -> (i32, i32, i32) {
    %c0_i32 = arith.constant 0 : i32
    %c0_i32_0 = arith.constant 0 : i32
    %c0_i32_1 = arith.constant 0 : i32
    return %c0_i32, %c0_i32_0, %arg1 : i32, i32, i32
  }
  func.func @transform_2(%arg0: i32, %arg1: i32) -> (i32, i32) {
    %c0_i32 = arith.constant 0 : i32
    %c0_i32_0 = arith.constant 0 : i32
    return %c0_i32, %arg1 : i32, i32
  }
  func.func @transform_3(%arg0: i32, %arg1: i32) -> (i32, i32, i32) {
    %c0_i32 = arith.constant 0 : i32
    %c0_i32_0 = arith.constant 0 : i32
    return %arg0, %c0_i32, %arg1 : i32, i32, i32
  }
}

module attributes {stable_mosaic.version = 11 : i64} {
  func.func @_matmul_bias_act_kernel(%arg0: i32, %arg1: i32, %arg2: i32, %arg3: memref<32x128xbf16, #tpu.memory_space<vmem>>, %arg4: memref<128x128xbf16, #tpu.memory_space<vmem>>, %arg5: memref<1x128xf32, #tpu.memory_space<vmem>>, %arg6: memref<32x128xbf16, #tpu.memory_space<vmem>>, %arg7: memref<32x128xf32, #tpu.memory_space<vmem>>) attributes {dimension_semantics = [#tpu.dimension_semantics<parallel>, #tpu.dimension_semantics<parallel>, #tpu.dimension_semantics<arbitrary>], iteration_bounds = array<i64: 1, 1, 1>, scalar_prefetch = 0 : i64, scratch_operands = 1 : i64, tpu.core_type = #tpu.core_type<tc>, window_params = [{transform_indices = @transform_0, window_bounds = array<i64: 32, 128>}, {transform_indices = @transform_1, window_bounds = array<i64: 128, 128>}, {transform_indices = @transform_2, window_bounds = array<i64: 1, 128>}, {transform_indices = @transform_3, window_bounds = array<i64: 32, 128>}]} {
    %c0_i32 = arith.constant 0 : i32
    %0 = arith.cmpi eq, %arg2, %c0_i32 : i32
    %1 = arith.extui %0 : i1 to i32
    %c0_i32_0 = arith.constant 0 : i32
    %2 = arith.cmpi ne, %1, %c0_i32_0 : i32
    scf.if %2 {
      %cst_10 = arith.constant 0.000000e+00 : f32
      %12 = vector.broadcast %cst_10 : f32 to vector<32x128xf32>
      %c0_11 = arith.constant 0 : index
      %c0_12 = arith.constant 0 : index
      %13 = vector.load %arg7[%c0_11, %c0_12] : memref<32x128xf32, #tpu.memory_space<vmem>>, vector<32x128xf32>
      tpu.vector_store %arg7[%c0_11, %c0_12], %12 {strides = array<i32>} : memref<32x128xf32, #tpu.memory_space<vmem>>, vector<32x128xf32>,
    } else {
    }
    %c0 = arith.constant 0 : index
    %c0_1 = arith.constant 0 : index
    %3 = vector.load %arg7[%c0, %c0_1] : memref<32x128xf32, #tpu.memory_space<vmem>>, vector<32x128xf32>
    %c0_2 = arith.constant 0 : index
    %c0_3 = arith.constant 0 : index
    %4 = vector.load %arg3[%c0_2, %c0_3] : memref<32x128xbf16, #tpu.memory_space<vmem>>, vector<32x128xbf16>
    %c0_4 = arith.constant 0 : index
    %c0_5 = arith.constant 0 : index
    %5 = vector.load %arg4[%c0_4, %c0_5] : memref<128x128xbf16, #tpu.memory_space<vmem>>, vector<128x128xbf16>
    %cst = arith.constant dense<0.000000e+00> : vector<32x128xf32>
    %6 = tpu.matmul %4, %5, %cst {dimension_numbers = #tpu.dot_dimension_numbers<[1], [0], [0], [1], [0, 0, 1, 1], [], []>} : vector<32x128xbf16>, vector<128x128xbf16>, vector<32x128xf32> -> vector<32x128xf32>
    %7 = arith.addf %3, %6 : vector<32x128xf32>
    %c0_6 = arith.constant 0 : index
    %c0_7 = arith.constant 0 : index
    %8 = vector.load %arg7[%c0_6, %c0_7] : memref<32x128xf32, #tpu.memory_space<vmem>>, vector<32x128xf32>
    tpu.vector_store %arg7[%c0_6, %c0_7], %7 {strides = array<i32>} : memref<32x128xf32, #tpu.memory_space<vmem>>, vector<32x128xf32>,
    %c0_i32_8 = arith.constant 0 : i32
    %9 = arith.cmpi eq, %arg2, %c0_i32_8 : i32
    %10 = arith.extui %9 : i1 to i32
    %c0_i32_9 = arith.constant 0 : i32
    %11 = arith.cmpi ne, %10, %c0_i32_9 : i32
    scf.if %11 {
      %c0_10 = arith.constant 0 : index
      %c0_11 = arith.constant 0 : index
      %12 = vector.load %arg7[%c0_10, %c0_11] : memref<32x128xf32, #tpu.memory_space<vmem>>, vector<32x128xf32>
      %c0_12 = arith.constant 0 : index
      %c0_13 = arith.constant 0 : index
      %13 = vector.load %arg5[%c0_12, %c0_13] : memref<1x128xf32, #tpu.memory_space<vmem>>, vector<1x128xf32>
      %14 = vector.broadcast %13 : vector<1x128xf32> to vector<32x128xf32>
      %15 = arith.addf %12, %14 : vector<32x128xf32>
      %cst_14 = arith.constant 0.000000e+00 : f32
      %16 = vector.broadcast %cst_14 : f32 to vector<32x128xf32>
      %17 = arith.cmpf oge, %15, %16 : vector<32x128xf32>
      %cst_15 = arith.constant 0.00999999977 : f32
      %18 = vector.broadcast %cst_15 : f32 to vector<32x128xf32>
      %19 = arith.mulf %18, %15 : vector<32x128xf32>
      %20 = arith.select %17, %15, %19 : vector<32x128xi1>, vector<32x128xf32>
      %21 = arith.truncf %20 : vector<32x128xf32> to vector<32x128xbf16>
      %c0_16 = arith.constant 0 : index
      %c0_17 = arith.constant 0 : index
      %22 = vector.load %arg6[%c0_16, %c0_17] : memref<32x128xbf16, #tpu.memory_space<vmem>>, vector<32x128xbf16>
      tpu.vector_store %arg6[%c0_16, %c0_17], %21 {strides = array<i32>} : memref<32x128xbf16, #tpu.memory_space<vmem>>, vector<32x128xbf16>,
    } else {
    }
    return
  }
  func.func @transform_0(%arg0: i32, %arg1: i32, %arg2: i32) -> (i32, i32) {
    %c0_i32 = arith.constant 0 : i32
    return %arg0, %arg2 : i32, i32
  }
  func.func @transform_1(%arg0: i32, %arg1: i32, %arg2: i32) -> (i32, i32) {
    %c0_i32 = arith.constant 0 : i32
    return %arg2, %arg1 : i32, i32
  }
  func.func @transform_2(%arg0: i32, %arg1: i32, %arg2: i32) -> (i32, i32) {
    %c0_i32 = arith.constant 0 : i32
    %c0_i32_0 = arith.constant 0 : i32
    return %c0_i32, %arg1 : i32, i32
  }
  func.func @transform_3(%arg0: i32, %arg1: i32, %arg2: i32) -> (i32, i32) {
    %c0_i32 = arith.constant 0 : i32
    return %arg0, %arg1 : i32, i32
  }
}

module attributes {stable_mosaic.version = 11 : i64} {
  func.func @_matmul_bias_act_kernel(%arg0: i32, %arg1: i32, %arg2: i32, %arg3: memref<8x128xbf16, #tpu.memory_space<vmem>>, %arg4: memref<128x128xbf16, #tpu.memory_space<vmem>>, %arg5: memref<1x128xf32, #tpu.memory_space<vmem>>, %arg6: memref<8x128xbf16, #tpu.memory_space<vmem>>, %arg7: memref<8x128xf32, #tpu.memory_space<vmem>>) attributes {dimension_semantics = [#tpu.dimension_semantics<parallel>, #tpu.dimension_semantics<parallel>, #tpu.dimension_semantics<arbitrary>], iteration_bounds = array<i64: 1, 1, 1>, scalar_prefetch = 0 : i64, scratch_operands = 1 : i64, tpu.core_type = #tpu.core_type<tc>, window_params = [{transform_indices = @transform_0, window_bounds = array<i64: 8, 128>}, {transform_indices = @transform_1, window_bounds = array<i64: 128, 128>}, {transform_indices = @transform_2, window_bounds = array<i64: 1, 128>}, {transform_indices = @transform_3, window_bounds = array<i64: 8, 128>}]} {
    %c0_i32 = arith.constant 0 : i32
    %0 = arith.cmpi eq, %arg2, %c0_i32 : i32
    %1 = arith.extui %0 : i1 to i32
    %c0_i32_0 = arith.constant 0 : i32
    %2 = arith.cmpi ne, %1, %c0_i32_0 : i32
    scf.if %2 {
      %cst_10 = arith.constant 0.000000e+00 : f32
      %12 = vector.broadcast %cst_10 : f32 to vector<8x128xf32>
      %c0_11 = arith.constant 0 : index
      %c0_12 = arith.constant 0 : index
      %13 = vector.load %arg7[%c0_11, %c0_12] : memref<8x128xf32, #tpu.memory_space<vmem>>, vector<8x128xf32>
      tpu.vector_store %arg7[%c0_11, %c0_12], %12 {strides = array<i32>} : memref<8x128xf32, #tpu.memory_space<vmem>>, vector<8x128xf32>,
    } else {
    }
    %c0 = arith.constant 0 : index
    %c0_1 = arith.constant 0 : index
    %3 = vector.load %arg7[%c0, %c0_1] : memref<8x128xf32, #tpu.memory_space<vmem>>, vector<8x128xf32>
    %c0_2 = arith.constant 0 : index
    %c0_3 = arith.constant 0 : index
    %4 = vector.load %arg3[%c0_2, %c0_3] : memref<8x128xbf16, #tpu.memory_space<vmem>>, vector<8x128xbf16>
    %c0_4 = arith.constant 0 : index
    %c0_5 = arith.constant 0 : index
    %5 = vector.load %arg4[%c0_4, %c0_5] : memref<128x128xbf16, #tpu.memory_space<vmem>>, vector<128x128xbf16>
    %cst = arith.constant dense<0.000000e+00> : vector<8x128xf32>
    %6 = tpu.matmul %4, %5, %cst {dimension_numbers = #tpu.dot_dimension_numbers<[1], [0], [0], [1], [0, 0, 1, 1], [], []>} : vector<8x128xbf16>, vector<128x128xbf16>, vector<8x128xf32> -> vector<8x128xf32>
    %7 = arith.addf %3, %6 : vector<8x128xf32>
    %c0_6 = arith.constant 0 : index
    %c0_7 = arith.constant 0 : index
    %8 = vector.load %arg7[%c0_6, %c0_7] : memref<8x128xf32, #tpu.memory_space<vmem>>, vector<8x128xf32>
    tpu.vector_store %arg7[%c0_6, %c0_7], %7 {strides = array<i32>} : memref<8x128xf32, #tpu.memory_space<vmem>>, vector<8x128xf32>,
    %c0_i32_8 = arith.constant 0 : i32
    %9 = arith.cmpi eq, %arg2, %c0_i32_8 : i32
    %10 = arith.extui %9 : i1 to i32
    %c0_i32_9 = arith.constant 0 : i32
    %11 = arith.cmpi ne, %10, %c0_i32_9 : i32
    scf.if %11 {
      %c0_10 = arith.constant 0 : index
      %c0_11 = arith.constant 0 : index
      %12 = vector.load %arg7[%c0_10, %c0_11] : memref<8x128xf32, #tpu.memory_space<vmem>>, vector<8x128xf32>
      %c0_12 = arith.constant 0 : index
      %c0_13 = arith.constant 0 : index
      %13 = vector.load %arg5[%c0_12, %c0_13] : memref<1x128xf32, #tpu.memory_space<vmem>>, vector<1x128xf32>
      %14 = vector.broadcast %13 : vector<1x128xf32> to vector<8x128xf32>
      %15 = arith.addf %12, %14 : vector<8x128xf32>
      %cst_14 = arith.constant 0.000000e+00 : f32
      %16 = vector.broadcast %cst_14 : f32 to vector<8x128xf32>
      %17 = arith.cmpf oge, %15, %16 : vector<8x128xf32>
      %cst_15 = arith.constant 0.00999999977 : f32
      %18 = vector.broadcast %cst_15 : f32 to vector<8x128xf32>
      %19 = arith.mulf %18, %15 : vector<8x128xf32>
      %20 = arith.select %17, %15, %19 : vector<8x128xi1>, vector<8x128xf32>
      %21 = arith.truncf %20 : vector<8x128xf32> to vector<8x128xbf16>
      %c0_16 = arith.constant 0 : index
      %c0_17 = arith.constant 0 : index
      %22 = vector.load %arg6[%c0_16, %c0_17] : memref<8x128xbf16, #tpu.memory_space<vmem>>, vector<8x128xbf16>
      tpu.vector_store %arg6[%c0_16, %c0_17], %21 {strides = array<i32>} : memref<8x128xbf16, #tpu.memory_space<vmem>>, vector<8x128xbf16>,
    } else {
    }
    return
  }
  func.func @transform_0(%arg0: i32, %arg1: i32, %arg2: i32) -> (i32, i32) {
    %c0_i32 = arith.constant 0 : i32
    return %arg0, %arg2 : i32, i32
  }
  func.func @transform_1(%arg0: i32, %arg1: i32, %arg2: i32) -> (i32, i32) {
    %c0_i32 = arith.constant 0 : i32
    return %arg2, %arg1 : i32, i32
  }
  func.func @transform_2(%arg0: i32, %arg1: i32, %arg2: i32) -> (i32, i32) {
    %c0_i32 = arith.constant 0 : i32
    %c0_i32_0 = arith.constant 0 : i32
    return %c0_i32, %arg1 : i32, i32
  }
  func.func @transform_3(%arg0: i32, %arg1: i32, %arg2: i32) -> (i32, i32) {
    %c0_i32 = arith.constant 0 : i32
    return %arg0, %arg1 : i32, i32
  }
}

module attributes {stable_mosaic.version = 11 : i64} {
  func.func @_matmul_bias_act_kernel(%arg0: i32, %arg1: i32, %arg2: i32, %arg3: memref<8x128xbf16, #tpu.memory_space<vmem>>, %arg4: memref<128x128xbf16, #tpu.memory_space<vmem>>, %arg5: memref<1x128xf32, #tpu.memory_space<vmem>>, %arg6: memref<8x128xf32, #tpu.memory_space<vmem>>, %arg7: memref<8x128xf32, #tpu.memory_space<vmem>>) attributes {dimension_semantics = [#tpu.dimension_semantics<parallel>, #tpu.dimension_semantics<parallel>, #tpu.dimension_semantics<arbitrary>], iteration_bounds = array<i64: 1, 1, 1>, scalar_prefetch = 0 : i64, scratch_operands = 1 : i64, tpu.core_type = #tpu.core_type<tc>, window_params = [{transform_indices = @transform_0, window_bounds = array<i64: 8, 128>}, {transform_indices = @transform_1, window_bounds = array<i64: 128, 128>}, {transform_indices = @transform_2, window_bounds = array<i64: 1, 128>}, {transform_indices = @transform_3, window_bounds = array<i64: 8, 128>}]} {
    %c0_i32 = arith.constant 0 : i32
    %0 = arith.cmpi eq, %arg2, %c0_i32 : i32
    %1 = arith.extui %0 : i1 to i32
    %c0_i32_0 = arith.constant 0 : i32
    %2 = arith.cmpi ne, %1, %c0_i32_0 : i32
    scf.if %2 {
      %cst_10 = arith.constant 0.000000e+00 : f32
      %12 = vector.broadcast %cst_10 : f32 to vector<8x128xf32>
      %c0_11 = arith.constant 0 : index
      %c0_12 = arith.constant 0 : index
      %13 = vector.load %arg7[%c0_11, %c0_12] : memref<8x128xf32, #tpu.memory_space<vmem>>, vector<8x128xf32>
      tpu.vector_store %arg7[%c0_11, %c0_12], %12 {strides = array<i32>} : memref<8x128xf32, #tpu.memory_space<vmem>>, vector<8x128xf32>,
    } else {
    }
    %c0 = arith.constant 0 : index
    %c0_1 = arith.constant 0 : index
    %3 = vector.load %arg7[%c0, %c0_1] : memref<8x128xf32, #tpu.memory_space<vmem>>, vector<8x128xf32>
    %c0_2 = arith.constant 0 : index
    %c0_3 = arith.constant 0 : index
    %4 = vector.load %arg3[%c0_2, %c0_3] : memref<8x128xbf16, #tpu.memory_space<vmem>>, vector<8x128xbf16>
    %c0_4 = arith.constant 0 : index
    %c0_5 = arith.constant 0 : index
    %5 = vector.load %arg4[%c0_4, %c0_5] : memref<128x128xbf16, #tpu.memory_space<vmem>>, vector<128x128xbf16>
    %cst = arith.constant dense<0.000000e+00> : vector<8x128xf32>
    %6 = tpu.matmul %4, %5, %cst {dimension_numbers = #tpu.dot_dimension_numbers<[1], [0], [0], [1], [0, 0, 1, 1], [], []>} : vector<8x128xbf16>, vector<128x128xbf16>, vector<8x128xf32> -> vector<8x128xf32>
    %7 = arith.addf %3, %6 : vector<8x128xf32>
    %c0_6 = arith.constant 0 : index
    %c0_7 = arith.constant 0 : index
    %8 = vector.load %arg7[%c0_6, %c0_7] : memref<8x128xf32, #tpu.memory_space<vmem>>, vector<8x128xf32>
    tpu.vector_store %arg7[%c0_6, %c0_7], %7 {strides = array<i32>} : memref<8x128xf32, #tpu.memory_space<vmem>>, vector<8x128xf32>,
    %c0_i32_8 = arith.constant 0 : i32
    %9 = arith.cmpi eq, %arg2, %c0_i32_8 : i32
    %10 = arith.extui %9 : i1 to i32
    %c0_i32_9 = arith.constant 0 : i32
    %11 = arith.cmpi ne, %10, %c0_i32_9 : i32
    scf.if %11 {
      %c0_10 = arith.constant 0 : index
      %c0_11 = arith.constant 0 : index
      %12 = vector.load %arg7[%c0_10, %c0_11] : memref<8x128xf32, #tpu.memory_space<vmem>>, vector<8x128xf32>
      %c0_12 = arith.constant 0 : index
      %c0_13 = arith.constant 0 : index
      %13 = vector.load %arg5[%c0_12, %c0_13] : memref<1x128xf32, #tpu.memory_space<vmem>>, vector<1x128xf32>
      %14 = vector.broadcast %13 : vector<1x128xf32> to vector<8x128xf32>
      %15 = arith.addf %12, %14 : vector<8x128xf32>
      %c0_14 = arith.constant 0 : index
      %c0_15 = arith.constant 0 : index
      %16 = vector.load %arg6[%c0_14, %c0_15] : memref<8x128xf32, #tpu.memory_space<vmem>>, vector<8x128xf32>
      tpu.vector_store %arg6[%c0_14, %c0_15], %15 {strides = array<i32>} : memref<8x128xf32, #tpu.memory_space<vmem>>, vector<8x128xf32>,
    } else {
    }
    return
  }
  func.func @transform_0(%arg0: i32, %arg1: i32, %arg2: i32) -> (i32, i32) {
    %c0_i32 = arith.constant 0 : i32
    return %arg0, %arg2 : i32, i32
  }
  func.func @transform_1(%arg0: i32, %arg1: i32, %arg2: i32) -> (i32, i32) {
    %c0_i32 = arith.constant 0 : i32
    return %arg2, %arg1 : i32, i32
  }
  func.func @transform_2(%arg0: i32, %arg1: i32, %arg2: i32) -> (i32, i32) {
    %c0_i32 = arith.constant 0 : i32
    %c0_i32_0 = arith.constant 0 : i32
    return %c0_i32, %arg1 : i32, i32
  }
  func.func @transform_3(%arg0: i32, %arg1: i32, %arg2: i32) -> (i32, i32) {
    %c0_i32 = arith.constant 0 : i32
    return %arg0, %arg1 : i32, i32
  }
}

</mosaic_0001>

<llo_original>
// kernel: gradual_style_block_forward.6
$region0: #{gradual_style_block_forward.6}
  #allocation0 [shape = 'u32[]', space=smem, size = 0x4, offset = 0x4, fixed_abs, tag = 'smem constant byte address 0x4 - core index']
  #allocation1 [shape = 'u32[144,128]{1,0:T(1,128)}', space=vmem, size = 0x12000, scoped, tag = 'internal scratch']
  #allocation2 [shape = 'f32[32,128]{1,0:T(8,128)}', space=vmem, size = 0x4000, scoped, tag = 'scratch operand']
  %s0 = inlined_call_operand.vmem [shape: bf16[32,128], index: 0, kind: input, shape index: {}]
  %s1 = inlined_call_operand.vmem [shape: bf16[128,128], index: 1, kind: input, shape index: {}]
  %s2 = inlined_call_operand.vmem [shape: f32[1,128], index: 2, kind: input, shape index: {}]
  %s3 = inlined_call_operand.vmem [shape: bf16[32,128], index: 3, kind: output, shape index: {}]
  %s4 = sld [smem:[#allocation0]]
  $region30: #{gradual_style_block_forward.6} parent=0
    _
  %s6 = ssub.s32 1, %s4
  %s7 = scalar_select 0, %s6, %s4
  // Predicated region
  $region2: #{gradual_style_block_forward.6} parent=0 // pred_check
    _
  $region3: #{gradual_style_block_forward.6} parent=0 // pred_check_branch
    %9 = sbr.rel (0) target = $region5
  $region4: #{gradual_style_block_forward.6} parent=0 // pred_region
    _
  $region5: #{gradual_style_block_forward.6} parent=0 // pred_fallthru
    _
  // Predicated region
  $region6: #{gradual_style_block_forward.6} parent=0 // pred_check
    _
  $region7: #{gradual_style_block_forward.6} parent=0 // pred_check_branch
    %11 = sbr.rel (0) target = $region9
  $region8: #{gradual_style_block_forward.6} parent=0 // pred_region
    _
  $region9: #{gradual_style_block_forward.6} parent=0 // pred_fallthru
    _
  // Predicated region
  $region10: #{gradual_style_block_forward.6} parent=0 // pred_check
    _
  $region11: #{gradual_style_block_forward.6} parent=0 // pred_check_branch
    %13 = sbr.rel (0) target = $region13
  $region12: #{gradual_style_block_forward.6} parent=0 // pred_region
    _
  $region13: #{gradual_style_block_forward.6} parent=0 // pred_fallthru
    _
  %p15 = scmp.eq.s32.totalorder 0, 0
  // Predicated region
  $region14: #{gradual_style_block_forward.6} parent=0 // pred_check
    %p16 = pneg %p15
  $region15: #{gradual_style_block_forward.6} parent=0 // pred_check_branch
    %18 = sbr.rel (%p16) target = $region17
  $region16: #{gradual_style_block_forward.6} parent=0 // pred_region
    %19 = vst [vmem:[#allocation2] sm:$0xff] 0.0
    %20 = vst [vmem:[#allocation2 + $0x8] sm:$0xff] 0.0
    %21 = vst [vmem:[#allocation2 + $0x10] sm:$0xff] 0.0
    %22 = vst [vmem:[#allocation2 + $0x18] sm:$0xff] 0.0
  $region17: #{gradual_style_block_forward.6} parent=0 // pred_fallthru
    _
  %v23 = vld [vmem:[#allocation2] sm:$0xff]
  %v24 = vld [vmem:[#allocation2 + $0x8] sm:$0xff]
  %v25 = vld [vmem:[#allocation2 + $0x10] sm:$0xff]
  %v26 = vld [vmem:[#allocation2 + $0x18] sm:$0xff]
  %v27 = vld [vmem:[%s0] sm:$0xf]
  %v28 = vld [vmem:[%s0 + $0x4] sm:$0xf]
  %v29 = vld [vmem:[%s0 + $0x8] sm:$0xf]
  %v30 = vld [vmem:[%s0 + $0xc] sm:$0xf]
  %v31 = vld [vmem:[%s1] sm:$0xf]
  %v32 = vld [vmem:[%s1 + $0x4] sm:$0xf]
  %v33 = vld [vmem:[%s1 + $0x8] sm:$0xf]
  %v34 = vld [vmem:[%s1 + $0xc] sm:$0xf]
  %v35 = vld [vmem:[%s1 + $0x10] sm:$0xf]
  %v36 = vld [vmem:[%s1 + $0x14] sm:$0xf]
  %v37 = vld [vmem:[%s1 + $0x18] sm:$0xf]
  %v38 = vld [vmem:[%s1 + $0x1c] sm:$0xf]
  %v39 = vld [vmem:[%s1 + $0x20] sm:$0xf]
  %v40 = vld [vmem:[%s1 + $0x24] sm:$0xf]
  %v41 = vld [vmem:[%s1 + $0x28] sm:$0xf]
  %v42 = vld [vmem:[%s1 + $0x2c] sm:$0xf]
  %v43 = vld [vmem:[%s1 + $0x30] sm:$0xf]
  %v44 = vld [vmem:[%s1 + $0x34] sm:$0xf]
  %v45 = vld [vmem:[%s1 + $0x38] sm:$0xf]
  %v46 = vld [vmem:[%s1 + $0x3c] sm:$0xf]
  %v51 = vunpack.c.l.b16 %v27
  %v52 = vunpack.c.l.b16 %v28
  %v53 = vunpack.c.l.b16 %v29
  %v54 = vunpack.c.l.b16 %v30
  %v55 = vpack.c.b16 %v52, %v51
  %v56 = vpack.c.b16 %v54, %v53
  %v75 = vunpack.c.l.b16 %v31
  %v76 = vunpack.c.l.b16 %v32
  %v77 = vunpack.c.l.b16 %v33
  %v78 = vunpack.c.l.b16 %v34
  %v79 = vunpack.c.l.b16 %v35
  %v80 = vunpack.c.l.b16 %v36
  %v81 = vunpack.c.l.b16 %v37
  %v82 = vunpack.c.l.b16 %v38
  %v83 = vunpack.c.l.b16 %v39
  %v84 = vunpack.c.l.b16 %v40
  %v85 = vunpack.c.l.b16 %v41
  %v86 = vunpack.c.l.b16 %v42
  %v87 = vunpack.c.l.b16 %v43
  %v88 = vunpack.c.l.b16 %v44
  %v89 = vunpack.c.l.b16 %v45
  %v90 = vunpack.c.l.b16 %v46
  %v91 = vpack.c.b16 %v76, %v75
  %v92 = vpack.c.b16 %v78, %v77
  %v93 = vpack.c.b16 %v80, %v79
  %v94 = vpack.c.b16 %v82, %v81
  %v95 = vpack.c.b16 %v84, %v83
  %v96 = vpack.c.b16 %v86, %v85
  %v97 = vpack.c.b16 %v88, %v87
  %v98 = vpack.c.b16 %v90, %v89
  %107 = vmatprep.subr.bf16.mxu0 0
  %108 = vmatpush1.bf16.msra.mxu0 %v91
  %109 = vmatprep.subr.bf16.mxu0 0
  %110 = vmatpush1.bf16.msra.mxu0 %v92
  %111 = vmatprep.subr.bf16.mxu0 0
  %112 = vmatpush1.bf16.msra.mxu0 %v93
  %113 = vmatprep.subr.bf16.mxu0 0
  %114 = vmatpush1.bf16.msra.mxu0 %v94
  %115 = vmatprep.subr.bf16.mxu0 0
  %116 = vmatpush1.bf16.msra.mxu0 %v95
  %117 = vmatprep.subr.bf16.mxu0 0
  %118 = vmatpush1.bf16.msra.mxu0 %v96
  %119 = vmatprep.subr.bf16.mxu0 0
  %120 = vmatpush1.bf16.msra.mxu0 %v97
  %121 = vmatprep.subr.bf16.mxu0 0
  %122 = vmatpush1.bf16.msra.mxu0 %v98
  %123 = vmatprep.subr.bf16.mxu0 0
  %124 = vmatpush1.bf16.msra.mxu0 0
  %125 = vmatprep.subr.bf16.mxu0 0
  %126 = vmatpush1.bf16.msra.mxu0 0
  %127 = vmatprep.subr.bf16.mxu0 0
  %128 = vmatpush1.bf16.msra.mxu0 0
  %129 = vmatprep.subr.bf16.mxu0 0
  %130 = vmatpush1.bf16.msra.mxu0 0
  %131 = vmatprep.subr.bf16.mxu0 0
  %132 = vmatpush1.bf16.msra.mxu0 0
  %133 = vmatprep.subr.bf16.mxu0 0
  %134 = vmatpush1.bf16.msra.mxu0 0
  %135 = vmatprep.subr.bf16.mxu0 0
  %136 = vmatpush1.bf16.msra.mxu0 0
  %137 = vmatprep.subr.bf16.mxu0 0
  %138 = vmatpush1.bf16.msra.mxu0 0
  %139 = vmatprep.mubr.bf16.mxu0 0
  %140 = vmatmul.mubr.bf16.gmra.mrb[0].mxu0 %v55
  %v141 = vpop.f32.mrb[0].mxu0
  %v142 = vadd.f32 0.0, %v141
  %v143 = vpop.f32.mrb[0].mxu0
  %v144 = vpop.f32.mrb[0].mxu0
  %v145 = vadd.f32 0.0, %v144
  %v146 = vpop.f32.mrb[0].mxu0
  %147 = vmatprep.mubr.bf16.mxu0 0
  %148 = vmatmul.mubr.bf16.gmra.mrb[0].mxu0 %v56
  %v149 = vpop.f32.mrb[0].mxu0
  %v150 = vadd.f32 0.0, %v149
  %v151 = vpop.f32.mrb[0].mxu0
  %v152 = vpop.f32.mrb[0].mxu0
  %v153 = vadd.f32 0.0, %v152
  %v154 = vpop.f32.mrb[0].mxu0
  %155 = vdwg.mxu0
  %v156 = vadd.f32 %v23, %v142
  %v157 = vadd.f32 %v24, %v145
  %v158 = vadd.f32 %v25, %v150
  %v159 = vadd.f32 %v26, %v153
  %160 = vst [vmem:[#allocation2] sm:$0xff] %v156
  %161 = vst [vmem:[#allocation2 + $0x8] sm:$0xff] %v157
  %162 = vst [vmem:[#allocation2 + $0x10] sm:$0xff] %v158
  %163 = vst [vmem:[#allocation2 + $0x18] sm:$0xff] %v159
  // Predicated region
  $region18: #{gradual_style_block_forward.6} parent=0 // pred_check
    %p164 = pneg %p15
  $region19: #{gradual_style_block_forward.6} parent=0 // pred_check_branch
    %166 = sbr.rel (%p164) target = $region21
  $region20: #{gradual_style_block_forward.6} parent=0 // pred_region
    %v167 = vld [vmem:[#allocation2] sm:$0xff]
    %v168 = vld [vmem:[#allocation2 + $0x8] sm:$0xff]
    %v169 = vld [vmem:[#allocation2 + $0x10] sm:$0xff]
    %v170 = vld [vmem:[#allocation2 + $0x18] sm:$0xff]
    %v171 = vld [vmem:[%s2] sm:$0x1]
    %v173 = vlaneseq
    %v174 = vshrl.u32 %v173, 7
    %v175 = vsub.s32 0, %v174
    %v176 = vrot.slane %v171, %v175
    %v178 = vadd.f32 %v167, %v176
    %v179 = vadd.f32 %v168, %v176
    %v180 = vadd.f32 %v169, %v176
    %v181 = vadd.f32 %v170, %v176
    %vm182 = vcmp.ge.f32.partialorder %v178, 0.0
    %vm183 = vcmp.ge.f32.partialorder %v179, 0.0
    %vm184 = vcmp.ge.f32.partialorder %v180, 0.0
    %vm185 = vcmp.ge.f32.partialorder %v181, 0.0
    %v186 = vmul.f32 %v178, 0.01
    %v187 = vmul.f32 %v179, 0.01
    %v188 = vmul.f32 %v180, 0.01
    %v189 = vmul.f32 %v181, 0.01
    %v190 = vsel %vm182, %v178, %v186
    %v191 = vsel %vm183, %v179, %v187
    %v192 = vsel %vm184, %v180, %v188
    %v193 = vsel %vm185, %v181, %v189
    %v194 = vpack.c.bf16 %v191, %v190
    %v195 = vpack.c.bf16 %v193, %v192
    %v198 = vunpack.c.l.b16 %v194
    %v199 = vunpack.c.h.b16 %v194
    %v200 = vunpack.c.l.b16 %v195
    %v201 = vunpack.c.h.b16 %v195
    %v202 = vpack.c.b16 %v198, %v198
    %v203 = vpack.c.b16 %v199, %v199
    %v204 = vpack.c.b16 %v200, %v200
    %v205 = vpack.c.b16 %v201, %v201
    %210 = vst [vmem:[%s3] sm:$0xf] %v202
    %211 = vst [vmem:[%s3 + $0x4] sm:$0xf] %v203
    %212 = vst [vmem:[%s3 + $0x8] sm:$0xf] %v204
    %213 = vst [vmem:[%s3 + $0xc] sm:$0xf] %v205
  $region21: #{gradual_style_block_forward.6} parent=0 // pred_fallthru
    _
  // Predicated region
  $region22: #{gradual_style_block_forward.6} parent=0 // pred_check
    _
  $region23: #{gradual_style_block_forward.6} parent=0 // pred_check_branch
    %215 = sbr.rel (0) target = $region25
  $region24: #{gradual_style_block_forward.6} parent=0 // pred_region
    _
  $region25: #{gradual_style_block_forward.6} parent=0 // pred_fallthru
    _
  // Predicated region
  $region26: #{gradual_style_block_forward.6} parent=0 // pred_check
    _
  $region27: #{gradual_style_block_forward.6} parent=0 // pred_check_branch
    %217 = sbr.rel (0) target = $region29
  $region28: #{gradual_style_block_forward.6} parent=0 // pred_region
    _
  $region29: #{gradual_style_block_forward.6} parent=0 // pred_fallthru
    _

// kernel: gradual_style_block_forward.5
$region0: #{gradual_style_block_forward.5}
  #allocation0 [shape = 'u32[]', space=smem, size = 0x4, offset = 0x4, fixed_abs, tag = 'smem constant byte address 0x4 - core index']
  #allocation1 [shape = 'u32[144,128]{1,0:T(1,128)}', space=vmem, size = 0x12000, scoped, tag = 'internal scratch']
  #allocation2 [shape = 'f32[64,8]{1,0:T(8,128)}', space=vmem, size = 0x8000, scoped, tag = 'scratch operand']
  %s0 = inlined_call_operand.vmem [shape: f32[2,2,2,9,9,4], index: 0, kind: input, shape index: {}]
  %s1 = inlined_call_operand.vmem [shape: bf16[9,4,8], index: 1, kind: input, shape index: {}]
  %s2 = inlined_call_operand.vmem [shape: f32[1,8], index: 2, kind: input, shape index: {}]
  %s3 = inlined_call_operand.vmem [shape: bf16[2,64,8], index: 3, kind: output, shape index: {}]
  %s4 = sld [smem:[#allocation0]]
  $region45: #{gradual_style_block_forward.5} parent=0
    _
  %s6 = ssub.s32 1, %s4
  %s7 = scalar_select 0, %s6, %s4
  loop: start=0, step=1, limit=4
  $region2: #{gradual_style_block_forward.5} parent=0 // loop_pre_header
    _
  $region3: #{gradual_style_block_forward.5} parent=0 // loop_header
    %s9 = sphi 0, %s13
    %p10 = scmp.ge.s32.totalorder %s9, 4
    %s16 = sphi 0, %s28
    %s17 = sphi 0, %s24
    %s18 = sphi 0, %s16
    %s19 = sphi 0, %s17
    %s20 = sphi 0, %s18
    %s21 = sphi 0, %s19
    %s31 = sphi 0, %s33
    %s34 = sphi 0, %s31
    %s35 = sphi 0, %s34
    %s51 = sphi 0, %s35
    %s57 = sphi 0, %s59
    %s60 = sphi 0, %s57
    %s61 = sphi 0, %s60
    %s77 = sphi 0, %s61
    %s83 = sphi 0, %s85
    %s86 = sphi 0, %s83
    %s87 = sphi 0, %s86
    %s103 = sphi 0, %s87
    %s111 = sphi 0, %s113
    %s114 = sphi 0, %s111
    %s115 = sphi 0, %s114
    %s131 = sphi 0, %s115
  $region4: #{gradual_style_block_forward.5} parent=0 // loop_header_branch
    %12 = sbr.rel (%p10) target = $region8
  $region5: #{gradual_style_block_forward.5} parent=0 // loop_body
    %s14 = ssub.s32 %s9, 1
    %s15 = ssub.s32 %s9, 2
    %s22 = sadd.s32 1, %s17
    %p23 = scmp.ge.s32.totalorder %s22, 1
    %s24 = scalar_select %p23, 0, %s22
    %s25 = sadd.s32 1, %s16
    %s26 = scalar_select %p23, %s25, %s16
    %p27 = scmp.ge.s32.totalorder %s26, 2
    %s28 = scalar_select %p27, 0, %s26
    %s29 = ssub.s32 %s16, %s28
    %p30 = scmp.eq.s32.totalorder %s29, 0
    %s32 = sadd.s32 %s31, 1
    %s33 = scalar_select %p30, %s31, %s32
    %p36 = pneg %p30
    %p37 = scmp.eq.s32.totalorder %s9, 1
    %p38 = por %p36, %p37
    %p39 = scmp.ne.s32.totalorder %s31, %s34
    %p40 = scmp.eq.s32.totalorder %s9, 0
    %p41 = por %p39, %p40
    %p42 = scmp.ne.s32.totalorder %s31, %s34
    %p43 = scmp.eq.s32.totalorder %s14, 1
    %p44 = por %p42, %p43
    %p45 = scmp.ne.s32.totalorder %s34, %s35
    %p46 = scmp.eq.s32.totalorder %s14, 0
    %p47 = por %p45, %p46
    %p48 = scmp.ne.s32.totalorder %s34, %s35
    %p49 = scmp.eq.s32.totalorder %s15, 1
    %p50 = por %p48, %p49
    %p52 = scmp.ne.s32.totalorder %s35, %s51
    %p53 = scmp.eq.s32.totalorder %s15, 0
    %p54 = por %p52, %p53
    %s55 = ssub.s32 %s17, %s24
    %p56 = scmp.eq.s32.totalorder %s55, 0
    %s58 = sadd.s32 %s57, 1
    %s59 = scalar_select %p56, %s57, %s58
    %p62 = pneg %p56
    %p63 = scmp.eq.s32.totalorder %s9, 1
    %p64 = por %p62, %p63
    %p65 = scmp.ne.s32.totalorder %s57, %s60
    %p66 = scmp.eq.s32.totalorder %s9, 0
    %p67 = por %p65, %p66
    %p68 = scmp.ne.s32.totalorder %s57, %s60
    %p69 = scmp.eq.s32.totalorder %s14, 1
    %p70 = por %p68, %p69
    %p71 = scmp.ne.s32.totalorder %s60, %s61
    %p72 = scmp.eq.s32.totalorder %s14, 0
    %p73 = por %p71, %p72
    %p74 = scmp.ne.s32.totalorder %s60, %s61
    %p75 = scmp.eq.s32.totalorder %s15, 1
    %p76 = por %p74, %p75
    %p78 = scmp.ne.s32.totalorder %s61, %s77
    %p79 = scmp.eq.s32.totalorder %s15, 0
    %p80 = por %p78, %p79
    %s81 = ssub.s32 %s17, %s24
    %p82 = scmp.eq.s32.totalorder %s81, 0
    %s84 = sadd.s32 %s83, 1
    %s85 = scalar_select %p82, %s83, %s84
    %p88 = pneg %p82
    %p89 = scmp.eq.s32.totalorder %s9, 1
    %p90 = por %p88, %p89
    %p91 = scmp.ne.s32.totalorder %s83, %s86
    %p92 = scmp.eq.s32.totalorder %s9, 0
    %p93 = por %p91, %p92
    %p94 = scmp.ne.s32.totalorder %s83, %s86
    %p95 = scmp.eq.s32.totalorder %s14, 1
    %p96 = por %p94, %p95
    %p97 = scmp.ne.s32.totalorder %s86, %s87
    %p98 = scmp.eq.s32.totalorder %s14, 0
    %p99 = por %p97, %p98
    %p100 = scmp.ne.s32.totalorder %s86, %s87
    %p101 = scmp.eq.s32.totalorder %s15, 1
    %p102 = por %p100, %p101
    %p104 = scmp.ne.s32.totalorder %s87, %s103
    %p105 = scmp.eq.s32.totalorder %s15, 0
    %p106 = por %p104, %p105
    %s107 = ssub.s32 %s16, %s28
    %s108 = ssub.s32 %s17, %s24
    %s109 = sor.u32 %s107, %s108
    %p110 = scmp.eq.s32.totalorder %s109, 0
    %s112 = sadd.s32 %s111, 1
    %s113 = scalar_select %p110, %s111, %s112
    %p116 = pneg %p110
    %p117 = scmp.eq.s32.totalorder %s9, 1
    %p118 = por %p116, %p117
    %p119 = scmp.ne.s32.totalorder %s111, %s114
    %p120 = scmp.eq.s32.totalorder %s9, 0
    %p121 = por %p119, %p120
    %p122 = scmp.ne.s32.totalorder %s111, %s114
    %p123 = scmp.eq.s32.totalorder %s14, 1
    %p124 = por %p122, %p123
    %p125 = scmp.ne.s32.totalorder %s114, %s115
    %p126 = scmp.eq.s32.totalorder %s14, 0
    %p127 = por %p125, %p126
    %p128 = scmp.ne.s32.totalorder %s114, %s115
    %p129 = scmp.eq.s32.totalorder %s15, 1
    %p130 = por %p128, %p129
    %p132 = scmp.ne.s32.totalorder %s115, %s131
    %p133 = scmp.eq.s32.totalorder %s15, 0
    %p134 = por %p132, %p133
    %p135 = scmp.le.s32.totalorder 1, %s9
    %p136 = scmp.lt.s32.totalorder %s9, 3
    %p137 = pnand %p135, %p136
    %p138 = pneg %p137
    // Predicated region
    $region9: #{gradual_style_block_forward.5} parent=5 // pred_check
      _
    $region10: #{gradual_style_block_forward.5} parent=5 // pred_check_branch
      %140 = sbr.rel (%p137) target = $region12
    $region11: #{gradual_style_block_forward.5} parent=5 // pred_region
      %s141 = ssub.s32 %s9, 1
      // Predicated region
      $region13: #{gradual_style_block_forward.5} parent=11 // pred_check
        %p142 = pneg %p73
      $region14: #{gradual_style_block_forward.5} parent=11 // pred_check_branch
        %144 = sbr.rel (%p142) target = $region16
      $region15: #{gradual_style_block_forward.5} parent=11 // pred_region
        %p145 = scmp.lt.s32.totalorder %s19, 0
        %s146 = scalar_select %p145, %s19, 0
        %s147 = smul.addr %s146, 2
        %s148 = scalar_lea.vmem %s1, %s147
      $region16: #{gradual_style_block_forward.5} parent=11 // pred_fallthru
        _
      // Predicated region
      $region17: #{gradual_style_block_forward.5} parent=11 // pred_check
        %p149 = pneg %p99
      $region18: #{gradual_style_block_forward.5} parent=11 // pred_check_branch
        %151 = sbr.rel (%p149) target = $region20
      $region19: #{gradual_style_block_forward.5} parent=11 // pred_region
        %p152 = scmp.lt.s32.totalorder %s19, 0
        %s153 = scalar_select %p152, %s19, 0
        %s154 = scalar_lea.vmem %s2, %s153
      $region20: #{gradual_style_block_forward.5} parent=11 // pred_fallthru
        _
    $region12: #{gradual_style_block_forward.5} parent=5 // pred_fallthru
      _
    %p155 = scmp.lt.s32.totalorder %s9, 2
    // Predicated region
    $region21: #{gradual_style_block_forward.5} parent=5 // pred_check
      %p156 = pneg %p155
    $region22: #{gradual_style_block_forward.5} parent=5 // pred_check_branch
      %158 = sbr.rel (%p156) target = $region24
    $region23: #{gradual_style_block_forward.5} parent=5 // pred_region
      // Predicated region
      $region25: #{gradual_style_block_forward.5} parent=23 // pred_check
        %p159 = pneg %p41
      $region26: #{gradual_style_block_forward.5} parent=23 // pred_check_branch
        %161 = sbr.rel (%p159) target = $region28
      $region27: #{gradual_style_block_forward.5} parent=23 // pred_region
        %p162 = scmp.lt.s32.totalorder %s16, 1
        %s163 = scalar_select %p162, %s16, 1
        %s164 = smul.addr %s163, 72
        %s165 = smul.addr %s164, 8
        %s166 = scalar_lea.vmem %s0, %s165
      $region28: #{gradual_style_block_forward.5} parent=23 // pred_fallthru
        _
    $region24: #{gradual_style_block_forward.5} parent=5 // pred_fallthru
      _
    %p167 = scmp.le.s32.totalorder 1, %s9
    %p168 = scmp.lt.s32.totalorder %s9, 3
    %p169 = pnand %p167, %p168
    %p170 = pneg %p169
    // Predicated region
    $region29: #{gradual_style_block_forward.5} parent=5 // pred_check
      _
    $region30: #{gradual_style_block_forward.5} parent=5 // pred_check_branch
      %172 = sbr.rel (%p169) target = $region32
    $region31: #{gradual_style_block_forward.5} parent=5 // pred_region
      %s173 = ssub.s32 %s9, 1
      %p174 = scmp.lt.s32.totalorder %s18, 1
      %s175 = scalar_select %p174, %s18, 1
      %s176 = smul.addr %s175, 72
      %s177 = smul.addr %s176, 8
      %s178 = scalar_lea.vmem %s0, %s177
      %p179 = pneg %p47
      %p180 = pneg %p44
      %p181 = scmp.lt.s32.totalorder %s19, 0
      %s182 = scalar_select %p181, %s19, 0
      %s183 = smul.addr %s182, 2
      %s184 = scalar_lea.vmem %s1, %s183
      %p185 = pneg %p73
      %p186 = pneg %p70
      %p187 = scmp.lt.s32.totalorder %s19, 0
      %s188 = scalar_select %p187, %s19, 0
      %s189 = scalar_lea.vmem %s2, %s188
      %p190 = pneg %p99
      %p191 = pneg %p96
      %p192 = pneg %p127
      %p193 = pneg %p124
      %p194 = scmp.lt.s32.totalorder %s18, 1
      %s195 = scalar_select %p194, %s18, 1
      %p196 = scmp.lt.s32.totalorder %s19, 0
      %s197 = scalar_select %p196, %s19, 0
      %s198 = smul.addr %s195, 8
      %s199 = sadd.s32 %s197, %s198
      %s200 = smul.addr %s199, 4
      %s201 = scalar_lea.vmem %s3, %s200
      %p202 = scmp.lt.s32.totalorder %s18, 1
      %s203 = scalar_select %p202, %s18, 1
      %s204 = smul.addr %s203, 72
      %s205 = smul.addr %s204, 8
      %s206 = scalar_lea.vmem %s0, %s205
      %p207 = scmp.lt.s32.totalorder %s19, 0
      %s208 = scalar_select %p207, %s19, 0
      %s209 = smul.addr %s208, 2
      %s210 = scalar_lea.vmem %s1, %s209
      %p211 = scmp.lt.s32.totalorder %s19, 0
      %s212 = scalar_select %p211, %s19, 0
      %s213 = scalar_lea.vmem %s2, %s212
      %p214 = scmp.lt.s32.totalorder %s18, 1
      %s215 = scalar_select %p214, %s18, 1
      %p216 = scmp.lt.s32.totalorder %s19, 0
      %s217 = scalar_select %p216, %s19, 0
      %s218 = smul.addr %s215, 8
      %s219 = sadd.s32 %s217, %s218
      %s220 = smul.addr %s219, 4
      %s221 = scalar_lea.vmem %s3, %s220
      %vm223 = vcmask 64512
      %224 = vst.msk [vmem:[#allocation2] sm:$0xff] %vm223, 0.0
      %225 = vst.msk [vmem:[#allocation2 + $0x8] sm:$0xff] %vm223, 0.0
      %226 = vst.msk [vmem:[#allocation2 + $0x10] sm:$0xff] %vm223, 0.0
      %227 = vst.msk [vmem:[#allocation2 + $0x18] sm:$0xff] %vm223, 0.0
      %228 = vst.msk [vmem:[#allocation2 + $0x20] sm:$0xff] %vm223, 0.0
      %229 = vst.msk [vmem:[#allocation2 + $0x28] sm:$0xff] %vm223, 0.0
      %230 = vst.msk [vmem:[#allocation2 + $0x30] sm:$0xff] %vm223, 0.0
      %231 = vst.msk [vmem:[#allocation2 + $0x38] sm:$0xff] %vm223, 0.0
      %v232 = vld [vmem:[%s206] sm:$0xff]
      %v233 = vld [vmem:[%s206 + $0x10] sm:$0xff]
      %v234 = vld [vmem:[%s206 + $0x20] sm:$0xff]
      %v235 = vld [vmem:[%s206 + $0x30] sm:$0xff]
      %v236 = vld [vmem:[%s206 + $0x40] sm:$0xff]
      %v237 = vld [vmem:[%s206 + $0x50] sm:$0xff]
      %v238 = vld [vmem:[%s206 + $0x60] sm:$0xff]
      %v239 = vld [vmem:[%s206 + $0x70] sm:$0xff]
      %v240 = vpack.c.bf16 %v233, %v232
      %v241 = vpack.c.bf16 %v235, %v234
      %v242 = vpack.c.bf16 %v237, %v236
      %v243 = vpack.c.bf16 %v239, %v238
      %v244 = vld [vmem:[#allocation2] sm:$0xff]
      %v245 = vld [vmem:[#allocation2 + $0x8] sm:$0xff]
      %v246 = vld [vmem:[#allocation2 + $0x10] sm:$0xff]
      %v247 = vld [vmem:[#allocation2 + $0x18] sm:$0xff]
      %v248 = vld [vmem:[#allocation2 + $0x20] sm:$0xff]
      %v249 = vld [vmem:[#allocation2 + $0x28] sm:$0xff]
      %v250 = vld [vmem:[#allocation2 + $0x30] sm:$0xff]
      %v251 = vld [vmem:[#allocation2 + $0x38] sm:$0xff]
      %v252 = vld [vmem:[%s210] sm:$0x3]
      %vm253 = vcmask 31744
      %v255 = vsel %vm253, %v240, 0
      %v258 = vsel %vm253, %v241, 0
      %v261 = vsel %vm253, %v242, 0
      %v264 = vsel %vm253, %v243, 0
      %vm266 = vcmask 1041408
      %v268 = vsel %vm266, %v252, 0
      %270 = vmatprep.subr.bf16.mxu0 0
      %271 = vmatpush1.bf16.msra.mxu0 %v268
      %272 = vmatprep.subr.bf16.mxu0 0
      %273 = vmatpush1.bf16.msra.mxu0 0
      %274 = vmatprep.subr.bf16.mxu0 0
      %275 = vmatpush1.bf16.msra.mxu0 0
      %276 = vmatprep.subr.bf16.mxu0 0
      %277 = vmatpush1.bf16.msra.mxu0 0
      %278 = vmatprep.subr.bf16.mxu0 0
      %279 = vmatpush1.bf16.msra.mxu0 0
      %280 = vmatprep.subr.bf16.mxu0 0
      %281 = vmatpush1.bf16.msra.mxu0 0
      %282 = vmatprep.subr.bf16.mxu0 0
      %283 = vmatpush1.bf16.msra.mxu0 0
      %284 = vmatprep.subr.bf16.mxu0 0
      %285 = vmatpush1.bf16.msra.mxu0 0
      %286 = vmatprep.subr.bf16.mxu0 0
      %287 = vmatpush1.bf16.msra.mxu0 0
      %288 = vmatprep.subr.bf16.mxu0 0
      %289 = vmatpush1.bf16.msra.mxu0 0
      %290 = vmatprep.subr.bf16.mxu0 0
      %291 = vmatpush1.bf16.msra.mxu0 0
      %292 = vmatprep.subr.bf16.mxu0 0
      %293 = vmatpush1.bf16.msra.mxu0 0
      %294 = vmatprep.subr.bf16.mxu0 0
      %295 = vmatpush1.bf16.msra.mxu0 0
      %296 = vmatprep.subr.bf16.mxu0 0
      %297 = vmatpush1.bf16.msra.mxu0 0
      %298 = vmatprep.subr.bf16.mxu0 0
      %299 = vmatpush1.bf16.msra.mxu0 0
      %300 = vmatprep.subr.bf16.mxu0 0
      %301 = vmatpush1.bf16.msra.mxu0 0
      %302 = vmatprep.mubr.bf16.mxu0 0
      %303 = vmatmul.mubr.bf16.gmra.mrb[0].mxu0 %v255
      %v304 = vpop.f32.mrb[0].mxu0
      %v305 = vadd.f32 0.0, %v304
      %v306 = vpop.f32.mrb[0].mxu0
      %v307 = vpop.f32.mrb[0].mxu0
      %v308 = vadd.f32 0.0, %v307
      %v309 = vpop.f32.mrb[0].mxu0
      %310 = vmatprep.mubr.bf16.mxu0 0
      %311 = vmatmul.mubr.bf16.gmra.mrb[0].mxu0 %v258
      %v312 = vpop.f32.mrb[0].mxu0
      %v313 = vadd.f32 0.0, %v312
      %v314 = vpop.f32.mrb[0].mxu0
      %v315 = vpop.f32.mrb[0].mxu0
      %v316 = vadd.f32 0.0, %v315
      %v317 = vpop.f32.mrb[0].mxu0
      %318 = vmatprep.mubr.bf16.mxu0 0
      %319 = vmatmul.mubr.bf16.gmra.mrb[0].mxu0 %v261
      %v320 = vpop.f32.mrb[0].mxu0
      %v321 = vadd.f32 0.0, %v320
      %v322 = vpop.f32.mrb[0].mxu0
      %v323 = vpop.f32.mrb[0].mxu0
      %v324 = vadd.f32 0.0, %v323
      %v325 = vpop.f32.mrb[0].mxu0
      %326 = vmatprep.mubr.bf16.mxu0 0
      %327 = vmatmul.mubr.bf16.gmra.mrb[0].mxu0 %v264
      %v328 = vpop.f32.mrb[0].mxu0
      %v329 = vadd.f32 0.0, %v328
      %v330 = vpop.f32.mrb[0].mxu0
      %v331 = vpop.f32.mrb[0].mxu0
      %v332 = vadd.f32 0.0, %v331
      %v333 = vpop.f32.mrb[0].mxu0
      %334 = vdwg.mxu0
      %v335 = vadd.f32 %v244, %v305
      %v336 = vadd.f32 %v245, %v308
      %v337 = vadd.f32 %v246, %v313
      %v338 = vadd.f32 %v247, %v316
      %v339 = vadd.f32 %v248, %v321
      %v340 = vadd.f32 %v249, %v324
      %v341 = vadd.f32 %v250, %v329
      %v342 = vadd.f32 %v251, %v332
      %343 = vst.msk [vmem:[#allocation2] sm:$0xff] %vm223, %v335
      %344 = vst.msk [vmem:[#allocation2 + $0x8] sm:$0xff] %vm223, %v336
      %345 = vst.msk [vmem:[#allocation2 + $0x10] sm:$0xff] %vm223, %v337
      %346 = vst.msk [vmem:[#allocation2 + $0x18] sm:$0xff] %vm223, %v338
      %347 = vst.msk [vmem:[#allocation2 + $0x20] sm:$0xff] %vm223, %v339
      %348 = vst.msk [vmem:[#allocation2 + $0x28] sm:$0xff] %vm223, %v340
      %349 = vst.msk [vmem:[#allocation2 + $0x30] sm:$0xff] %vm223, %v341
      %350 = vst.msk [vmem:[#allocation2 + $0x38] sm:$0xff] %vm223, %v342
      %s351 = scalar_lea.vmem %s206, 144
      %v352 = vld [vmem:[%s351] sm:$0xff]
      %v353 = vld [vmem:[%s351 + $0x10] sm:$0xff]
      %v354 = vld [vmem:[%s351 + $0x20] sm:$0xff]
      %v355 = vld [vmem:[%s351 + $0x30] sm:$0xff]
      %v356 = vld [vmem:[%s351 + $0x40] sm:$0xff]
      %v357 = vld [vmem:[%s351 + $0x50] sm:$0xff]
      %v358 = vld [vmem:[%s351 + $0x60] sm:$0xff]
      %v359 = vld [vmem:[%s351 + $0x70] sm:$0xff]
      %v360 = vpack.c.bf16 %v353, %v352
      %v361 = vpack.c.bf16 %v355, %v354
      %v362 = vpack.c.bf16 %v357, %v356
      %v363 = vpack.c.bf16 %v359, %v358
      %v364 = vld [vmem:[#allocation2] sm:$0xff]
      %v365 = vld [vmem:[#allocation2 + $0x8] sm:$0xff]
      %v366 = vld [vmem:[#allocation2 + $0x10] sm:$0xff]
      %v367 = vld [vmem:[#allocation2 + $0x18] sm:$0xff]
      %v368 = vld [vmem:[#allocation2 + $0x20] sm:$0xff]
      %v369 = vld [vmem:[#allocation2 + $0x28] sm:$0xff]
      %v370 = vld [vmem:[#allocation2 + $0x30] sm:$0xff]
      %v371 = vld [vmem:[#allocation2 + $0x38] sm:$0xff]
      %s372 = scalar_lea.vmem %s210, 2
      %v373 = vld [vmem:[%s372] sm:$0x3]
      %v375 = vsel %vm253, %v360, 0
      %v378 = vsel %vm253, %v361, 0
      %v381 = vsel %vm253, %v362, 0
      %v384 = vsel %vm253, %v363, 0
      %v387 = vsel %vm266, %v373, 0
      %389 = vmatprep.subr.bf16.mxu0 0
      %390 = vmatpush1.bf16.msra.mxu0 %v387
      %391 = vmatprep.subr.bf16.mxu0 0
      %392 = vmatpush1.bf16.msra.mxu0 0
      %393 = vmatprep.subr.bf16.mxu0 0
      %394 = vmatpush1.bf16.msra.mxu0 0
      %395 = vmatprep.subr.bf16.mxu0 0
      %396 = vmatpush1.bf16.msra.mxu0 0
      %397 = vmatprep.subr.bf16.mxu0 0
      %398 = vmatpush1.bf16.msra.mxu0 0
      %399 = vmatprep.subr.bf16.mxu0 0
      %400 = vmatpush1.bf16.msra.mxu0 0
      %401 = vmatprep.subr.bf16.mxu0 0
      %402 = vmatpush1.bf16.msra.mxu0 0
      %403 = vmatprep.subr.bf16.mxu0 0
      %404 = vmatpush1.bf16.msra.mxu0 0
      %405 = vmatprep.subr.bf16.mxu0 0
      %406 = vmatpush1.bf16.msra.mxu0 0
      %407 = vmatprep.subr.bf16.mxu0 0
      %408 = vmatpush1.bf16.msra.mxu0 0
      %409 = vmatprep.subr.bf16.mxu0 0
      %410 = vmatpush1.bf16.msra.mxu0 0
      %411 = vmatprep.subr.bf16.mxu0 0
      %412 = vmatpush1.bf16.msra.mxu0 0
      %413 = vmatprep.subr.bf16.mxu0 0
      %414 = vmatpush1.bf16.msra.mxu0 0
      %415 = vmatprep.subr.bf16.mxu0 0
      %416 = vmatpush1.bf16.msra.mxu0 0
      %417 = vmatprep.subr.bf16.mxu0 0
      %418 = vmatpush1.bf16.msra.mxu0 0
      %419 = vmatprep.subr.bf16.mxu0 0
      %420 = vmatpush1.bf16.msra.mxu0 0
      %421 = vmatprep.mubr.bf16.mxu0 0
      %422 = vmatmul.mubr.bf16.gmra.mrb[0].mxu0 %v375
      %v423 = vpop.f32.mrb[0].mxu0
      %v424 = vadd.f32 0.0, %v423
      %v425 = vpop.f32.mrb[0].mxu0
      %v426 = vpop.f32.mrb[0].mxu0
      %v427 = vadd.f32 0.0, %v426
      %v428 = vpop.f32.mrb[0].mxu0
      %429 = vmatprep.mubr.bf16.mxu0 0
      %430 = vmatmul.mubr.bf16.gmra.mrb[0].mxu0 %v378
      %v431 = vpop.f32.mrb[0].mxu0
      %v432 = vadd.f32 0.0, %v431
      %v433 = vpop.f32.mrb[0].mxu0
      %v434 = vpop.f32.mrb[0].mxu0
      %v435 = vadd.f32 0.0, %v434
      %v436 = vpop.f32.mrb[0].mxu0
      %437 = vmatprep.mubr.bf16.mxu0 0
      %438 = vmatmul.mubr.bf16.gmra.mrb[0].mxu0 %v381
      %v439 = vpop.f32.mrb[0].mxu0
      %v440 = vadd.f32 0.0, %v439
      %v441 = vpop.f32.mrb[0].mxu0
      %v442 = vpop.f32.mrb[0].mxu0
      %v443 = vadd.f32 0.0, %v442
      %v444 = vpop.f32.mrb[0].mxu0
      %445 = vmatprep.mubr.bf16.mxu0 0
      %446 = vmatmul.mubr.bf16.gmra.mrb[0].mxu0 %v384
      %v447 = vpop.f32.mrb[0].mxu0
      %v448 = vadd.f32 0.0, %v447
      %v449 = vpop.f32.mrb[0].mxu0
      %v450 = vpop.f32.mrb[0].mxu0
      %v451 = vadd.f32 0.0, %v450
      %v452 = vpop.f32.mrb[0].mxu0
      %453 = vdwg.mxu0
      %v454 = vadd.f32 %v364, %v424
      %v455 = vadd.f32 %v365, %v427
      %v456 = vadd.f32 %v366, %v432
      %v457 = vadd.f32 %v367, %v435
      %v458 = vadd.f32 %v368, %v440
      %v459 = vadd.f32 %v369, %v443
      %v460 = vadd.f32 %v370, %v448
      %v461 = vadd.f32 %v371, %v451
      %462 = vst.msk [vmem:[#allocation2] sm:$0xff] %vm223, %v454
      %463 = vst.msk [vmem:[#allocation2 + $0x8] sm:$0xff] %vm223, %v455
      %464 = vst.msk [vmem:[#allocation2 + $0x10] sm:$0xff] %vm223, %v456
      %465 = vst.msk [vmem:[#allocation2 + $0x18] sm:$0xff] %vm223, %v457
      %466 = vst.msk [vmem:[#allocation2 + $0x20] sm:$0xff] %vm223, %v458
      %467 = vst.msk [vmem:[#allocation2 + $0x28] sm:$0xff] %vm223, %v459
      %468 = vst.msk [vmem:[#allocation2 + $0x30] sm:$0xff] %vm223, %v460
      %469 = vst.msk [vmem:[#allocation2 + $0x38] sm:$0xff] %vm223, %v461
      %v470 = vld [vmem:[%s206 + $0x1] sm:$0xff]
      %v471 = vld [vmem:[%s206 + $0x11] sm:$0xff]
      %v472 = vld [vmem:[%s206 + $0x21] sm:$0xff]
      %v473 = vld [vmem:[%s206 + $0x31] sm:$0xff]
      %v474 = vld [vmem:[%s206 + $0x41] sm:$0xff]
      %v475 = vld [vmem:[%s206 + $0x51] sm:$0xff]
      %v476 = vld [vmem:[%s206 + $0x61] sm:$0xff]
      %v477 = vld [vmem:[%s206 + $0x71] sm:$0xff]
      %v478 = vpack.c.bf16 %v471, %v470
      %v479 = vpack.c.bf16 %v473, %v472
      %v480 = vpack.c.bf16 %v475, %v474
      %v481 = vpack.c.bf16 %v477, %v476
      %v482 = vld [vmem:[#allocation2] sm:$0xff]
      %v483 = vld [vmem:[#allocation2 + $0x8] sm:$0xff]
      %v484 = vld [vmem:[#allocation2 + $0x10] sm:$0xff]
      %v485 = vld [vmem:[#allocation2 + $0x18] sm:$0xff]
      %v486 = vld [vmem:[#allocation2 + $0x20] sm:$0xff]
      %v487 = vld [vmem:[#allocation2 + $0x28] sm:$0xff]
      %v488 = vld [vmem:[#allocation2 + $0x30] sm:$0xff]
      %v489 = vld [vmem:[#allocation2 + $0x38] sm:$0xff]
      %s490 = scalar_lea.vmem %s210, 4
      %v491 = vld [vmem:[%s490] sm:$0x3]
      %v493 = vsel %vm253, %v478, 0
      %v496 = vsel %vm253, %v479, 0
      %v499 = vsel %vm253, %v480, 0
      %v502 = vsel %vm253, %v481, 0
      %v505 = vsel %vm266, %v491, 0
      %507 = vmatprep.subr.bf16.mxu0 0
      %508 = vmatpush1.bf16.msra.mxu0 %v505
      %509 = vmatprep.subr.bf16.mxu0 0
      %510 = vmatpush1.bf16.msra.mxu0 0
      %511 = vmatprep.subr.bf16.mxu0 0
      %512 = vmatpush1.bf16.msra.mxu0 0
      %513 = vmatprep.subr.bf16.mxu0 0
      %514 = vmatpush1.bf16.msra.mxu0 0
      %515 = vmatprep.subr.bf16.mxu0 0
      %516 = vmatpush1.bf16.msra.mxu0 0
      %517 = vmatprep.subr.bf16.mxu0 0
      %518 = vmatpush1.bf16.msra.mxu0 0
      %519 = vmatprep.subr.bf16.mxu0 0
      %520 = vmatpush1.bf16.msra.mxu0 0
      %521 = vmatprep.subr.bf16.mxu0 0
      %522 = vmatpush1.bf16.msra.mxu0 0
      %523 = vmatprep.subr.bf16.mxu0 0
      %524 = vmatpush1.bf16.msra.mxu0 0
      %525 = vmatprep.subr.bf16.mxu0 0
      %526 = vmatpush1.bf16.msra.mxu0 0
      %527 = vmatprep.subr.bf16.mxu0 0
      %528 = vmatpush1.bf16.msra.mxu0 0
      %529 = vmatprep.subr.bf16.mxu0 0
      %530 = vmatpush1.bf16.msra.mxu0 0
      %531 = vmatprep.subr.bf16.mxu0 0
      %532 = vmatpush1.bf16.msra.mxu0 0
      %533 = vmatprep.subr.bf16.mxu0 0
      %534 = vmatpush1.bf16.msra.mxu0 0
      %535 = vmatprep.subr.bf16.mxu0 0
      %536 = vmatpush1.bf16.msra.mxu0 0
      %537 = vmatprep.subr.bf16.mxu0 0
      %538 = vmatpush1.bf16.msra.mxu0 0
      %539 = vmatprep.mubr.bf16.mxu0 0
      %540 = vmatmul.mubr.bf16.gmra.mrb[0].mxu0 %v493
      %v541 = vpop.f32.mrb[0].mxu0
      %v542 = vadd.f32 0.0, %v541
      %v543 = vpop.f32.mrb[0].mxu0
      %v544 = vpop.f32.mrb[0].mxu0
      %v545 = vadd.f32 0.0, %v544
      %v546 = vpop.f32.mrb[0].mxu0
      %547 = vmatprep.mubr.bf16.mxu0 0
      %548 = vmatmul.mubr.bf16.gmra.mrb[0].mxu0 %v496
      %v549 = vpop.f32.mrb[0].mxu0
      %v550 = vadd.f32 0.0, %v549
      %v551 = vpop.f32.mrb[0].mxu0
      %v552 = vpop.f32.mrb[0].mxu0
      %v553 = vadd.f32 0.0, %v552
      %v554 = vpop.f32.mrb[0].mxu0
      %555 = vmatprep.mubr.bf16.mxu0 0
      %556 = vmatmul.mubr.bf16.gmra.mrb[0].mxu0 %v499
      %v557 = vpop.f32.mrb[0].mxu0
      %v558 = vadd.f32 0.0, %v557
      %v559 = vpop.f32.mrb[0].mxu0
      %v560 = vpop.f32.mrb[0].mxu0
      %v561 = vadd.f32 0.0, %v560
      %v562 = vpop.f32.mrb[0].mxu0
      %563 = vmatprep.mubr.bf16.mxu0 0
      %564 = vmatmul.mubr.bf16.gmra.mrb[0].mxu0 %v502
      %v565 = vpop.f32.mrb[0].mxu0
      %v566 = vadd.f32 0.0, %v565
      %v567 = vpop.f32.mrb[0].mxu0
      %v568 = vpop.f32.mrb[0].mxu0
      %v569 = vadd.f32 0.0, %v568
      %v570 = vpop.f32.mrb[0].mxu0
      %571 = vdwg.mxu0
      %v572 = vadd.f32 %v482, %v542
      %v573 = vadd.f32 %v483, %v545
      %v574 = vadd.f32 %v484, %v550
      %v575 = vadd.f32 %v485, %v553
      %v576 = vadd.f32 %v486, %v558
      %v577 = vadd.f32 %v487, %v561
      %v578 = vadd.f32 %v488, %v566
      %v579 = vadd.f32 %v489, %v569
      %580 = vst.msk [vmem:[#allocation2] sm:$0xff] %vm223, %v572
      %581 = vst.msk [vmem:[#allocation2 + $0x8] sm:$0xff] %vm223, %v573
      %582 = vst.msk [vmem:[#allocation2 + $0x10] sm:$0xff] %vm223, %v574
      %583 = vst.msk [vmem:[#allocation2 + $0x18] sm:$0xff] %vm223, %v575
      %584 = vst.msk [vmem:[#allocation2 + $0x20] sm:$0xff] %vm223, %v576
      %585 = vst.msk [vmem:[#allocation2 + $0x28] sm:$0xff] %vm223, %v577
      %586 = vst.msk [vmem:[#allocation2 + $0x30] sm:$0xff] %vm223, %v578
      %587 = vst.msk [vmem:[#allocation2 + $0x38] sm:$0xff] %vm223, %v579
      %s588 = scalar_lea.vmem %s206, 288
      %v589 = vld [vmem:[%s588] sm:$0xff]
      %v590 = vld [vmem:[%s588 + $0x10] sm:$0xff]
      %v591 = vld [vmem:[%s588 + $0x20] sm:$0xff]
      %v592 = vld [vmem:[%s588 + $0x30] sm:$0xff]
      %v593 = vld [vmem:[%s588 + $0x40] sm:$0xff]
      %v594 = vld [vmem:[%s588 + $0x50] sm:$0xff]
      %v595 = vld [vmem:[%s588 + $0x60] sm:$0xff]
      %v596 = vld [vmem:[%s588 + $0x70] sm:$0xff]
      %v597 = vpack.c.bf16 %v590, %v589
      %v598 = vpack.c.bf16 %v592, %v591
      %v599 = vpack.c.bf16 %v594, %v593
      %v600 = vpack.c.bf16 %v596, %v595
      %v601 = vld [vmem:[#allocation2] sm:$0xff]
      %v602 = vld [vmem:[#allocation2 + $0x8] sm:$0xff]
      %v603 = vld [vmem:[#allocation2 + $0x10] sm:$0xff]
      %v604 = vld [vmem:[#allocation2 + $0x18] sm:$0xff]
      %v605 = vld [vmem:[#allocation2 + $0x20] sm:$0xff]
      %v606 = vld [vmem:[#allocation2 + $0x28] sm:$0xff]
      %v607 = vld [vmem:[#allocation2 + $0x30] sm:$0xff]
      %v608 = vld [vmem:[#allocation2 + $0x38] sm:$0xff]
      %s609 = scalar_lea.vmem %s210, 6
      %v610 = vld [vmem:[%s609] sm:$0x3]
      %v612 = vsel %vm253, %v597, 0
      %v615 = vsel %vm253, %v598, 0
      %v618 = vsel %vm253, %v599, 0
      %v621 = vsel %vm253, %v600, 0
      %v624 = vsel %vm266, %v610, 0
      %626 = vmatprep.subr.bf16.mxu0 0
      %627 = vmatpush1.bf16.msra.mxu0 %v624
      %628 = vmatprep.subr.bf16.mxu0 0
      %629 = vmatpush1.bf16.msra.mxu0 0
      %630 = vmatprep.subr.bf16.mxu0 0
      %631 = vmatpush1.bf16.msra.mxu0 0
      %632 = vmatprep.subr.bf16.mxu0 0
      %633 = vmatpush1.bf16.msra.mxu0 0
      %634 = vmatprep.subr.bf16.mxu0 0
      %635 = vmatpush1.bf16.msra.mxu0 0
      %636 = vmatprep.subr.bf16.mxu0 0
      %637 = vmatpush1.bf16.msra.mxu0 0
      %638 = vmatprep.subr.bf16.mxu0 0
      %639 = vmatpush1.bf16.msra.mxu0 0
      %640 = vmatprep.subr.bf16.mxu0 0
      %641 = vmatpush1.bf16.msra.mxu0 0
      %642 = vmatprep.subr.bf16.mxu0 0
      %643 = vmatpush1.bf16.msra.mxu0 0
      %644 = vmatprep.subr.bf16.mxu0 0
      %645 = vmatpush1.bf16.msra.mxu0 0
      %646 = vmatprep.subr.bf16.mxu0 0
      %647 = vmatpush1.bf16.msra.mxu0 0
      %648 = vmatprep.subr.bf16.mxu0 0
      %649 = vmatpush1.bf16.msra.mxu0 0
      %650 = vmatprep.subr.bf16.mxu0 0
      %651 = vmatpush1.bf16.msra.mxu0 0
      %652 = vmatprep.subr.bf16.mxu0 0
      %653 = vmatpush1.bf16.msra.mxu0 0
      %654 = vmatprep.subr.bf16.mxu0 0
      %655 = vmatpush1.bf16.msra.mxu0 0
      %656 = vmatprep.subr.bf16.mxu0 0
      %657 = vmatpush1.bf16.msra.mxu0 0
      %658 = vmatprep.mubr.bf16.mxu0 0
      %659 = vmatmul.mubr.bf16.gmra.mrb[0].mxu0 %v612
      %v660 = vpop.f32.mrb[0].mxu0
      %v661 = vadd.f32 0.0, %v660
      %v662 = vpop.f32.mrb[0].mxu0
      %v663 = vpop.f32.mrb[0].mxu0
      %v664 = vadd.f32 0.0, %v663
      %v665 = vpop.f32.mrb[0].mxu0
      %666 = vmatprep.mubr.bf16.mxu0 0
      %667 = vmatmul.mubr.bf16.gmra.mrb[0].mxu0 %v615
      %v668 = vpop.f32.mrb[0].mxu0
      %v669 = vadd.f32 0.0, %v668
      %v670 = vpop.f32.mrb[0].mxu0
      %v671 = vpop.f32.mrb[0].mxu0
      %v672 = vadd.f32 0.0, %v671
      %v673 = vpop.f32.mrb[0].mxu0
      %674 = vmatprep.mubr.bf16.mxu0 0
      %675 = vmatmul.mubr.bf16.gmra.mrb[0].mxu0 %v618
      %v676 = vpop.f32.mrb[0].mxu0
      %v677 = vadd.f32 0.0, %v676
      %v678 = vpop.f32.mrb[0].mxu0
      %v679 = vpop.f32.mrb[0].mxu0
      %v680 = vadd.f32 0.0, %v679
      %v681 = vpop.f32.mrb[0].mxu0
      %682 = vmatprep.mubr.bf16.mxu0 0
      %683 = vmatmul.mubr.bf16.gmra.mrb[0].mxu0 %v621
      %v684 = vpop.f32.mrb[0].mxu0
      %v685 = vadd.f32 0.0, %v684
      %v686 = vpop.f32.mrb[0].mxu0
      %v687 = vpop.f32.mrb[0].mxu0
      %v688 = vadd.f32 0.0, %v687
      %v689 = vpop.f32.mrb[0].mxu0
      %690 = vdwg.mxu0
      %v691 = vadd.f32 %v601, %v661
      %v692 = vadd.f32 %v602, %v664
      %v693 = vadd.f32 %v603, %v669
      %v694 = vadd.f32 %v604, %v672
      %v695 = vadd.f32 %v605, %v677
      %v696 = vadd.f32 %v606, %v680
      %v697 = vadd.f32 %v607, %v685
      %v698 = vadd.f32 %v608, %v688
      %699 = vst.msk [vmem:[#allocation2] sm:$0xff] %vm223, %v691
      %700 = vst.msk [vmem:[#allocation2 + $0x8] sm:$0xff] %vm223, %v692
      %701 = vst.msk [vmem:[#allocation2 + $0x10] sm:$0xff] %vm223, %v693
      %702 = vst.msk [vmem:[#allocation2 + $0x18] sm:$0xff] %vm223, %v694
      %703 = vst.msk [vmem:[#allocation2 + $0x20] sm:$0xff] %vm223, %v695
      %704 = vst.msk [vmem:[#allocation2 + $0x28] sm:$0xff] %vm223, %v696
      %705 = vst.msk [vmem:[#allocation2 + $0x30] sm:$0xff] %vm223, %v697
      %706 = vst.msk [vmem:[#allocation2 + $0x38] sm:$0xff] %vm223, %v698
      %s707 = scalar_lea.vmem %s206, 432
      %v708 = vld [vmem:[%s707] sm:$0xff]
      %v709 = vld [vmem:[%s707 + $0x10] sm:$0xff]
      %v710 = vld [vmem:[%s707 + $0x20] sm:$0xff]
      %v711 = vld [vmem:[%s707 + $0x30] sm:$0xff]
      %v712 = vld [vmem:[%s707 + $0x40] sm:$0xff]
      %v713 = vld [vmem:[%s707 + $0x50] sm:$0xff]
      %v714 = vld [vmem:[%s707 + $0x60] sm:$0xff]
      %v715 = vld [vmem:[%s707 + $0x70] sm:$0xff]
      %v716 = vpack.c.bf16 %v709, %v708
      %v717 = vpack.c.bf16 %v711, %v710
      %v718 = vpack.c.bf16 %v713, %v712
      %v719 = vpack.c.bf16 %v715, %v714
      %v720 = vld [vmem:[#allocation2] sm:$0xff]
      %v721 = vld [vmem:[#allocation2 + $0x8] sm:$0xff]
      %v722 = vld [vmem:[#allocation2 + $0x10] sm:$0xff]
      %v723 = vld [vmem:[#allocation2 + $0x18] sm:$0xff]
      %v724 = vld [vmem:[#allocation2 + $0x20] sm:$0xff]
      %v725 = vld [vmem:[#allocation2 + $0x28] sm:$0xff]
      %v726 = vld [vmem:[#allocation2 + $0x30] sm:$0xff]
      %v727 = vld [vmem:[#allocation2 + $0x38] sm:$0xff]
      %s728 = scalar_lea.vmem %s210, 8
      %v729 = vld [vmem:[%s728] sm:$0x3]
      %v731 = vsel %vm253, %v716, 0
      %v734 = vsel %vm253, %v717, 0
      %v737 = vsel %vm253, %v718, 0
      %v740 = vsel %vm253, %v719, 0
      %v743 = vsel %vm266, %v729, 0
      %745 = vmatprep.subr.bf16.mxu0 0
      %746 = vmatpush1.bf16.msra.mxu0 %v743
      %747 = vmatprep.subr.bf16.mxu0 0
      %748 = vmatpush1.bf16.msra.mxu0 0
      %749 = vmatprep.subr.bf16.mxu0 0
      %750 = vmatpush1.bf16.msra.mxu0 0
      %751 = vmatprep.subr.bf16.mxu0 0
      %752 = vmatpush1.bf16.msra.mxu0 0
      %753 = vmatprep.subr.bf16.mxu0 0
      %754 = vmatpush1.bf16.msra.mxu0 0
      %755 = vmatprep.subr.bf16.mxu0 0
      %756 = vmatpush1.bf16.msra.mxu0 0
      %757 = vmatprep.subr.bf16.mxu0 0
      %758 = vmatpush1.bf16.msra.mxu0 0
      %759 = vmatprep.subr.bf16.mxu0 0
      %760 = vmatpush1.bf16.msra.mxu0 0
      %761 = vmatprep.subr.bf16.mxu0 0
      %762 = vmatpush1.bf16.msra.mxu0 0
      %763 = vmatprep.subr.bf16.mxu0 0
      %764 = vmatpush1.bf16.msra.mxu0 0
      %765 = vmatprep.subr.bf16.mxu0 0
      %766 = vmatpush1.bf16.msra.mxu0 0
      %767 = vmatprep.subr.bf16.mxu0 0
      %768 = vmatpush1.bf16.msra.mxu0 0
      %769 = vmatprep.subr.bf16.mxu0 0
      %770 = vmatpush1.bf16.msra.mxu0 0
      %771 = vmatprep.subr.bf16.mxu0 0
      %772 = vmatpush1.bf16.msra.mxu0 0
      %773 = vmatprep.subr.bf16.mxu0 0
      %774 = vmatpush1.bf16.msra.mxu0 0
      %775 = vmatprep.subr.bf16.mxu0 0
      %776 = vmatpush1.bf16.msra.mxu0 0
      %777 = vmatprep.mubr.bf16.mxu0 0
      %778 = vmatmul.mubr.bf16.gmra.mrb[0].mxu0 %v731
      %v779 = vpop.f32.mrb[0].mxu0
      %v780 = vadd.f32 0.0, %v779
      %v781 = vpop.f32.mrb[0].mxu0
      %v782 = vpop.f32.mrb[0].mxu0
      %v783 = vadd.f32 0.0, %v782
      %v784 = vpop.f32.mrb[0].mxu0
      %785 = vmatprep.mubr.bf16.mxu0 0
      %786 = vmatmul.mubr.bf16.gmra.mrb[0].mxu0 %v734
      %v787 = vpop.f32.mrb[0].mxu0
      %v788 = vadd.f32 0.0, %v787
      %v789 = vpop.f32.mrb[0].mxu0
      %v790 = vpop.f32.mrb[0].mxu0
      %v791 = vadd.f32 0.0, %v790
      %v792 = vpop.f32.mrb[0].mxu0
      %793 = vmatprep.mubr.bf16.mxu0 0
      %794 = vmatmul.mubr.bf16.gmra.mrb[0].mxu0 %v737
      %v795 = vpop.f32.mrb[0].mxu0
      %v796 = vadd.f32 0.0, %v795
      %v797 = vpop.f32.mrb[0].mxu0
      %v798 = vpop.f32.mrb[0].mxu0
      %v799 = vadd.f32 0.0, %v798
      %v800 = vpop.f32.mrb[0].mxu0
      %801 = vmatprep.mubr.bf16.mxu0 0
      %802 = vmatmul.mubr.bf16.gmra.mrb[0].mxu0 %v740
      %v803 = vpop.f32.mrb[0].mxu0
      %v804 = vadd.f32 0.0, %v803
      %v805 = vpop.f32.mrb[0].mxu0
      %v806 = vpop.f32.mrb[0].mxu0
      %v807 = vadd.f32 0.0, %v806
      %v808 = vpop.f32.mrb[0].mxu0
      %809 = vdwg.mxu0
      %v810 = vadd.f32 %v720, %v780
      %v811 = vadd.f32 %v721, %v783
      %v812 = vadd.f32 %v722, %v788
      %v813 = vadd.f32 %v723, %v791
      %v814 = vadd.f32 %v724, %v796
      %v815 = vadd.f32 %v725, %v799
      %v816 = vadd.f32 %v726, %v804
      %v817 = vadd.f32 %v727, %v807
      %818 = vst.msk [vmem:[#allocation2] sm:$0xff] %vm223, %v810
      %819 = vst.msk [vmem:[#allocation2 + $0x8] sm:$0xff] %vm223, %v811
      %820 = vst.msk [vmem:[#allocation2 + $0x10] sm:$0xff] %vm223, %v812
      %821 = vst.msk [vmem:[#allocation2 + $0x18] sm:$0xff] %vm223, %v813
      %822 = vst.msk [vmem:[#allocation2 + $0x20] sm:$0xff] %vm223, %v814
      %823 = vst.msk [vmem:[#allocation2 + $0x28] sm:$0xff] %vm223, %v815
      %824 = vst.msk [vmem:[#allocation2 + $0x30] sm:$0xff] %vm223, %v816
      %825 = vst.msk [vmem:[#allocation2 + $0x38] sm:$0xff] %vm223, %v817
      %v826 = vld [vmem:[%s588 + $0x1] sm:$0xff]
      %v827 = vld [vmem:[%s588 + $0x11] sm:$0xff]
      %v828 = vld [vmem:[%s588 + $0x21] sm:$0xff]
      %v829 = vld [vmem:[%s588 + $0x31] sm:$0xff]
      %v830 = vld [vmem:[%s588 + $0x41] sm:$0xff]
      %v831 = vld [vmem:[%s588 + $0x51] sm:$0xff]
      %v832 = vld [vmem:[%s588 + $0x61] sm:$0xff]
      %v833 = vld [vmem:[%s588 + $0x71] sm:$0xff]
      %v834 = vpack.c.bf16 %v827, %v826
      %v835 = vpack.c.bf16 %v829, %v828
      %v836 = vpack.c.bf16 %v831, %v830
      %v837 = vpack.c.bf16 %v833, %v832
      %v838 = vld [vmem:[#allocation2] sm:$0xff]
      %v839 = vld [vmem:[#allocation2 + $0x8] sm:$0xff]
      %v840 = vld [vmem:[#allocation2 + $0x10] sm:$0xff]
      %v841 = vld [vmem:[#allocation2 + $0x18] sm:$0xff]
      %v842 = vld [vmem:[#allocation2 + $0x20] sm:$0xff]
      %v843 = vld [vmem:[#allocation2 + $0x28] sm:$0xff]
      %v844 = vld [vmem:[#allocation2 + $0x30] sm:$0xff]
      %v845 = vld [vmem:[#allocation2 + $0x38] sm:$0xff]
      %s846 = scalar_lea.vmem %s210, 10
      %v847 = vld [vmem:[%s846] sm:$0x3]
      %v849 = vsel %vm253, %v834, 0
      %v852 = vsel %vm253, %v835, 0
      %v855 = vsel %vm253, %v836, 0
      %v858 = vsel %vm253, %v837, 0
      %v861 = vsel %vm266, %v847, 0
      %863 = vmatprep.subr.bf16.mxu0 0
      %864 = vmatpush1.bf16.msra.mxu0 %v861
      %865 = vmatprep.subr.bf16.mxu0 0
      %866 = vmatpush1.bf16.msra.mxu0 0
      %867 = vmatprep.subr.bf16.mxu0 0
      %868 = vmatpush1.bf16.msra.mxu0 0
      %869 = vmatprep.subr.bf16.mxu0 0
      %870 = vmatpush1.bf16.msra.mxu0 0
      %871 = vmatprep.subr.bf16.mxu0 0
      %872 = vmatpush1.bf16.msra.mxu0 0
      %873 = vmatprep.subr.bf16.mxu0 0
      %874 = vmatpush1.bf16.msra.mxu0 0
      %875 = vmatprep.subr.bf16.mxu0 0
      %876 = vmatpush1.bf16.msra.mxu0 0
      %877 = vmatprep.subr.bf16.mxu0 0
      %878 = vmatpush1.bf16.msra.mxu0 0
      %879 = vmatprep.subr.bf16.mxu0 0
      %880 = vmatpush1.bf16.msra.mxu0 0
      %881 = vmatprep.subr.bf16.mxu0 0
      %882 = vmatpush1.bf16.msra.mxu0 0
      %883 = vmatprep.subr.bf16.mxu0 0
      %884 = vmatpush1.bf16.msra.mxu0 0
      %885 = vmatprep.subr.bf16.mxu0 0
      %886 = vmatpush1.bf16.msra.mxu0 0
      %887 = vmatprep.subr.bf16.mxu0 0
      %888 = vmatpush1.bf16.msra.mxu0 0
      %889 = vmatprep.subr.bf16.mxu0 0
      %890 = vmatpush1.bf16.msra.mxu0 0
      %891 = vmatprep.subr.bf16.mxu0 0
      %892 = vmatpush1.bf16.msra.mxu0 0
      %893 = vmatprep.subr.bf16.mxu0 0
      %894 = vmatpush1.bf16.msra.mxu0 0
      %895 = vmatprep.mubr.bf16.mxu0 0
      %896 = vmatmul.mubr.bf16.gmra.mrb[0].mxu0 %v849
      %v897 = vpop.f32.mrb[0].mxu0
      %v898 = vadd.f32 0.0, %v897
      %v899 = vpop.f32.mrb[0].mxu0
      %v900 = vpop.f32.mrb[0].mxu0
      %v901 = vadd.f32 0.0, %v900
      %v902 = vpop.f32.mrb[0].mxu0
      %903 = vmatprep.mubr.bf16.mxu0 0
      %904 = vmatmul.mubr.bf16.gmra.mrb[0].mxu0 %v852
      %v905 = vpop.f32.mrb[0].mxu0
      %v906 = vadd.f32 0.0, %v905
      %v907 = vpop.f32.mrb[0].mxu0
      %v908 = vpop.f32.mrb[0].mxu0
      %v909 = vadd.f32 0.0, %v908
      %v910 = vpop.f32.mrb[0].mxu0
      %911 = vmatprep.mubr.bf16.mxu0 0
      %912 = vmatmul.mubr.bf16.gmra.mrb[0].mxu0 %v855
      %v913 = vpop.f32.mrb[0].mxu0
      %v914 = vadd.f32 0.0, %v913
      %v915 = vpop.f32.mrb[0].mxu0
      %v916 = vpop.f32.mrb[0].mxu0
      %v917 = vadd.f32 0.0, %v916
      %v918 = vpop.f32.mrb[0].mxu0
      %919 = vmatprep.mubr.bf16.mxu0 0
      %920 = vmatmul.mubr.bf16.gmra.mrb[0].mxu0 %v858
      %v921 = vpop.f32.mrb[0].mxu0
      %v922 = vadd.f32 0.0, %v921
      %v923 = vpop.f32.mrb[0].mxu0
      %v924 = vpop.f32.mrb[0].mxu0
      %v925 = vadd.f32 0.0, %v924
      %v926 = vpop.f32.mrb[0].mxu0
      %927 = vdwg.mxu0
      %v928 = vadd.f32 %v838, %v898
      %v929 = vadd.f32 %v839, %v901
      %v930 = vadd.f32 %v840, %v906
      %v931 = vadd.f32 %v841, %v909
      %v932 = vadd.f32 %v842, %v914
      %v933 = vadd.f32 %v843, %v917
      %v934 = vadd.f32 %v844, %v922
      %v935 = vadd.f32 %v845, %v925
      %936 = vst.msk [vmem:[#allocation2] sm:$0xff] %vm223, %v928
      %937 = vst.msk [vmem:[#allocation2 + $0x8] sm:$0xff] %vm223, %v929
      %938 = vst.msk [vmem:[#allocation2 + $0x10] sm:$0xff] %vm223, %v930
      %939 = vst.msk [vmem:[#allocation2 + $0x18] sm:$0xff] %vm223, %v931
      %940 = vst.msk [vmem:[#allocation2 + $0x20] sm:$0xff] %vm223, %v932
      %941 = vst.msk [vmem:[#allocation2 + $0x28] sm:$0xff] %vm223, %v933
      %942 = vst.msk [vmem:[#allocation2 + $0x30] sm:$0xff] %vm223, %v934
      %943 = vst.msk [vmem:[#allocation2 + $0x38] sm:$0xff] %vm223, %v935
      %s944 = scalar_lea.vmem %s206, 16
      %v945 = vld [vmem:[%s944] sm:$0xff]
      %v946 = vld [vmem:[%s944 + $0x10] sm:$0xff]
      %v947 = vld [vmem:[%s944 + $0x20] sm:$0xff]
      %v948 = vld [vmem:[%s944 + $0x30] sm:$0xff]
      %v949 = vld [vmem:[%s944 + $0x40] sm:$0xff]
      %v950 = vld [vmem:[%s944 + $0x50] sm:$0xff]
      %v951 = vld [vmem:[%s944 + $0x60] sm:$0xff]
      %v952 = vld [vmem:[%s944 + $0x70] sm:$0xff]
      %v953 = vpack.c.bf16 %v946, %v945
      %v954 = vpack.c.bf16 %v948, %v947
      %v955 = vpack.c.bf16 %v950, %v949
      %v956 = vpack.c.bf16 %v952, %v951
      %v957 = vld [vmem:[#allocation2] sm:$0xff]
      %v958 = vld [vmem:[#allocation2 + $0x8] sm:$0xff]
      %v959 = vld [vmem:[#allocation2 + $0x10] sm:$0xff]
      %v960 = vld [vmem:[#allocation2 + $0x18] sm:$0xff]
      %v961 = vld [vmem:[#allocation2 + $0x20] sm:$0xff]
      %v962 = vld [vmem:[#allocation2 + $0x28] sm:$0xff]
      %v963 = vld [vmem:[#allocation2 + $0x30] sm:$0xff]
      %v964 = vld [vmem:[#allocation2 + $0x38] sm:$0xff]
      %s965 = scalar_lea.vmem %s210, 12
      %v966 = vld [vmem:[%s965] sm:$0x3]
      %v968 = vsel %vm253, %v953, 0
      %v971 = vsel %vm253, %v954, 0
      %v974 = vsel %vm253, %v955, 0
      %v977 = vsel %vm253, %v956, 0
      %v980 = vsel %vm266, %v966, 0
      %982 = vmatprep.subr.bf16.mxu0 0
      %983 = vmatpush1.bf16.msra.mxu0 %v980
      %984 = vmatprep.subr.bf16.mxu0 0
      %985 = vmatpush1.bf16.msra.mxu0 0
      %986 = vmatprep.subr.bf16.mxu0 0
      %987 = vmatpush1.bf16.msra.mxu0 0
      %988 = vmatprep.subr.bf16.mxu0 0
      %989 = vmatpush1.bf16.msra.mxu0 0
      %990 = vmatprep.subr.bf16.mxu0 0
      %991 = vmatpush1.bf16.msra.mxu0 0
      %992 = vmatprep.subr.bf16.mxu0 0
      %993 = vmatpush1.bf16.msra.mxu0 0
      %994 = vmatprep.subr.bf16.mxu0 0
      %995 = vmatpush1.bf16.msra.mxu0 0
      %996 = vmatprep.subr.bf16.mxu0 0
      %997 = vmatpush1.bf16.msra.mxu0 0
      %998 = vmatprep.subr.bf16.mxu0 0
      %999 = vmatpush1.bf16.msra.mxu0 0
      %1000 = vmatprep.subr.bf16.mxu0 0
      %1001 = vmatpush1.bf16.msra.mxu0 0
      %1002 = vmatprep.subr.bf16.mxu0 0
      %1003 = vmatpush1.bf16.msra.mxu0 0
      %1004 = vmatprep.subr.bf16.mxu0 0
      %1005 = vmatpush1.bf16.msra.mxu0 0
      %1006 = vmatprep.subr.bf16.mxu0 0
      %1007 = vmatpush1.bf16.msra.mxu0 0
      %1008 = vmatprep.subr.bf16.mxu0 0
      %1009 = vmatpush1.bf16.msra.mxu0 0
      %1010 = vmatprep.subr.bf16.mxu0 0
      %1011 = vmatpush1.bf16.msra.mxu0 0
      %1012 = vmatprep.subr.bf16.mxu0 0
      %1013 = vmatpush1.bf16.msra.mxu0 0
      %1014 = vmatprep.mubr.bf16.mxu0 0
      %1015 = vmatmul.mubr.bf16.gmra.mrb[0].mxu0 %v968
      %v1016 = vpop.f32.mrb[0].mxu0
      %v1017 = vadd.f32 0.0, %v1016
      %v1018 = vpop.f32.mrb[0].mxu0
      %v1019 = vpop.f32.mrb[0].mxu0
      %v1020 = vadd.f32 0.0, %v1019
      %v1021 = vpop.f32.mrb[0].mxu0
      %1022 = vmatprep.mubr.bf16.mxu0 0
      %1023 = vmatmul.mubr.bf16.gmra.mrb[0].mxu0 %v971
      %v1024 = vpop.f32.mrb[0].mxu0
      %v1025 = vadd.f32 0.0, %v1024
      %v1026 = vpop.f32.mrb[0].mxu0
      %v1027 = vpop.f32.mrb[0].mxu0
      %v1028 = vadd.f32 0.0, %v1027
      %v1029 = vpop.f32.mrb[0].mxu0
      %1030 = vmatprep.mubr.bf16.mxu0 0
      %1031 = vmatmul.mubr.bf16.gmra.mrb[0].mxu0 %v974
      %v1032 = vpop.f32.mrb[0].mxu0
      %v1033 = vadd.f32 0.0, %v1032
      %v1034 = vpop.f32.mrb[0].mxu0
      %v1035 = vpop.f32.mrb[0].mxu0
      %v1036 = vadd.f32 0.0, %v1035
      %v1037 = vpop.f32.mrb[0].mxu0
      %1038 = vmatprep.mubr.bf16.mxu0 0
      %1039 = vmatmul.mubr.bf16.gmra.mrb[0].mxu0 %v977
      %v1040 = vpop.f32.mrb[0].mxu0
      %v1041 = vadd.f32 0.0, %v1040
      %v1042 = vpop.f32.mrb[0].mxu0
      %v1043 = vpop.f32.mrb[0].mxu0
      %v1044 = vadd.f32 0.0, %v1043
      %v1045 = vpop.f32.mrb[0].mxu0
      %1046 = vdwg.mxu0
      %v1047 = vadd.f32 %v957, %v1017
      %v1048 = vadd.f32 %v958, %v1020
      %v1049 = vadd.f32 %v959, %v1025
      %v1050 = vadd.f32 %v960, %v1028
      %v1051 = vadd.f32 %v961, %v1033
      %v1052 = vadd.f32 %v962, %v1036
      %v1053 = vadd.f32 %v963, %v1041
      %v1054 = vadd.f32 %v964, %v1044
      %1055 = vst.msk [vmem:[#allocation2] sm:$0xff] %vm223, %v1047
      %1056 = vst.msk [vmem:[#allocation2 + $0x8] sm:$0xff] %vm223, %v1048
      %1057 = vst.msk [vmem:[#allocation2 + $0x10] sm:$0xff] %vm223, %v1049
      %1058 = vst.msk [vmem:[#allocation2 + $0x18] sm:$0xff] %vm223, %v1050
      %1059 = vst.msk [vmem:[#allocation2 + $0x20] sm:$0xff] %vm223, %v1051
      %1060 = vst.msk [vmem:[#allocation2 + $0x28] sm:$0xff] %vm223, %v1052
      %1061 = vst.msk [vmem:[#allocation2 + $0x30] sm:$0xff] %vm223, %v1053
      %1062 = vst.msk [vmem:[#allocation2 + $0x38] sm:$0xff] %vm223, %v1054
      %s1063 = scalar_lea.vmem %s206, 160
      %v1064 = vld [vmem:[%s1063] sm:$0xff]
      %v1065 = vld [vmem:[%s1063 + $0x10] sm:$0xff]
      %v1066 = vld [vmem:[%s1063 + $0x20] sm:$0xff]
      %v1067 = vld [vmem:[%s1063 + $0x30] sm:$0xff]
      %v1068 = vld [vmem:[%s1063 + $0x40] sm:$0xff]
      %v1069 = vld [vmem:[%s1063 + $0x50] sm:$0xff]
      %v1070 = vld [vmem:[%s1063 + $0x60] sm:$0xff]
      %v1071 = vld [vmem:[%s1063 + $0x70] sm:$0xff]
      %v1072 = vpack.c.bf16 %v1065, %v1064
      %v1073 = vpack.c.bf16 %v1067, %v1066
      %v1074 = vpack.c.bf16 %v1069, %v1068
      %v1075 = vpack.c.bf16 %v1071, %v1070
      %v1076 = vld [vmem:[#allocation2] sm:$0xff]
      %v1077 = vld [vmem:[#allocation2 + $0x8] sm:$0xff]
      %v1078 = vld [vmem:[#allocation2 + $0x10] sm:$0xff]
      %v1079 = vld [vmem:[#allocation2 + $0x18] sm:$0xff]
      %v1080 = vld [vmem:[#allocation2 + $0x20] sm:$0xff]
      %v1081 = vld [vmem:[#allocation2 + $0x28] sm:$0xff]
      %v1082 = vld [vmem:[#allocation2 + $0x30] sm:$0xff]
      %v1083 = vld [vmem:[#allocation2 + $0x38] sm:$0xff]
      %s1084 = scalar_lea.vmem %s210, 14
      %v1085 = vld [vmem:[%s1084] sm:$0x3]
      %v1087 = vsel %vm253, %v1072, 0
      %v1090 = vsel %vm253, %v1073, 0
      %v1093 = vsel %vm253, %v1074, 0
      %v1096 = vsel %vm253, %v1075, 0
      %v1099 = vsel %vm266, %v1085, 0
      %1101 = vmatprep.subr.bf16.mxu0 0
      %1102 = vmatpush1.bf16.msra.mxu0 %v1099
      %1103 = vmatprep.subr.bf16.mxu0 0
      %1104 = vmatpush1.bf16.msra.mxu0 0
      %1105 = vmatprep.subr.bf16.mxu0 0
      %1106 = vmatpush1.bf16.msra.mxu0 0
      %1107 = vmatprep.subr.bf16.mxu0 0
      %1108 = vmatpush1.bf16.msra.mxu0 0
      %1109 = vmatprep.subr.bf16.mxu0 0
      %1110 = vmatpush1.bf16.msra.mxu0 0
      %1111 = vmatprep.subr.bf16.mxu0 0
      %1112 = vmatpush1.bf16.msra.mxu0 0
      %1113 = vmatprep.subr.bf16.mxu0 0
      %1114 = vmatpush1.bf16.msra.mxu0 0
      %1115 = vmatprep.subr.bf16.mxu0 0
      %1116 = vmatpush1.bf16.msra.mxu0 0
      %1117 = vmatprep.subr.bf16.mxu0 0
      %1118 = vmatpush1.bf16.msra.mxu0 0
      %1119 = vmatprep.subr.bf16.mxu0 0
      %1120 = vmatpush1.bf16.msra.mxu0 0
      %1121 = vmatprep.subr.bf16.mxu0 0
      %1122 = vmatpush1.bf16.msra.mxu0 0
      %1123 = vmatprep.subr.bf16.mxu0 0
      %1124 = vmatpush1.bf16.msra.mxu0 0
      %1125 = vmatprep.subr.bf16.mxu0 0
      %1126 = vmatpush1.bf16.msra.mxu0 0
      %1127 = vmatprep.subr.bf16.mxu0 0
      %1128 = vmatpush1.bf16.msra.mxu0 0
      %1129 = vmatprep.subr.bf16.mxu0 0
      %1130 = vmatpush1.bf16.msra.mxu0 0
      %1131 = vmatprep.subr.bf16.mxu0 0
      %1132 = vmatpush1.bf16.msra.mxu0 0
      %1133 = vmatprep.mubr.bf16.mxu0 0
      %1134 = vmatmul.mubr.bf16.gmra.mrb[0].mxu0 %v1087
      %v1135 = vpop.f32.mrb[0].mxu0
      %v1136 = vadd.f32 0.0, %v1135
      %v1137 = vpop.f32.mrb[0].mxu0
      %v1138 = vpop.f32.mrb[0].mxu0
      %v1139 = vadd.f32 0.0, %v1138
      %v1140 = vpop.f32.mrb[0].mxu0
      %1141 = vmatprep.mubr.bf16.mxu0 0
      %1142 = vmatmul.mubr.bf16.gmra.mrb[0].mxu0 %v1090
      %v1143 = vpop.f32.mrb[0].mxu0
      %v1144 = vadd.f32 0.0, %v1143
      %v1145 = vpop.f32.mrb[0].mxu0
      %v1146 = vpop.f32.mrb[0].mxu0
      %v1147 = vadd.f32 0.0, %v1146
      %v1148 = vpop.f32.mrb[0].mxu0
      %1149 = vmatprep.mubr.bf16.mxu0 0
      %1150 = vmatmul.mubr.bf16.gmra.mrb[0].mxu0 %v1093
      %v1151 = vpop.f32.mrb[0].mxu0
      %v1152 = vadd.f32 0.0, %v1151
      %v1153 = vpop.f32.mrb[0].mxu0
      %v1154 = vpop.f32.mrb[0].mxu0
      %v1155 = vadd.f32 0.0, %v1154
      %v1156 = vpop.f32.mrb[0].mxu0
      %1157 = vmatprep.mubr.bf16.mxu0 0
      %1158 = vmatmul.mubr.bf16.gmra.mrb[0].mxu0 %v1096
      %v1159 = vpop.f32.mrb[0].mxu0
      %v1160 = vadd.f32 0.0, %v1159
      %v1161 = vpop.f32.mrb[0].mxu0
      %v1162 = vpop.f32.mrb[0].mxu0
      %v1163 = vadd.f32 0.0, %v1162
      %v1164 = vpop.f32.mrb[0].mxu0
      %1165 = vdwg.mxu0
      %v1166 = vadd.f32 %v1076, %v1136
      %v1167 = vadd.f32 %v1077, %v1139
      %v1168 = vadd.f32 %v1078, %v1144
      %v1169 = vadd.f32 %v1079, %v1147
      %v1170 = vadd.f32 %v1080, %v1152
      %v1171 = vadd.f32 %v1081, %v1155
      %v1172 = vadd.f32 %v1082, %v1160
      %v1173 = vadd.f32 %v1083, %v1163
      %1174 = vst.msk [vmem:[#allocation2] sm:$0xff] %vm223, %v1166
      %1175 = vst.msk [vmem:[#allocation2 + $0x8] sm:$0xff] %vm223, %v1167
      %1176 = vst.msk [vmem:[#allocation2 + $0x10] sm:$0xff] %vm223, %v1168
      %1177 = vst.msk [vmem:[#allocation2 + $0x18] sm:$0xff] %vm223, %v1169
      %1178 = vst.msk [vmem:[#allocation2 + $0x20] sm:$0xff] %vm223, %v1170
      %1179 = vst.msk [vmem:[#allocation2 + $0x28] sm:$0xff] %vm223, %v1171
      %1180 = vst.msk [vmem:[#allocation2 + $0x30] sm:$0xff] %vm223, %v1172
      %1181 = vst.msk [vmem:[#allocation2 + $0x38] sm:$0xff] %vm223, %v1173
      %v1182 = vld [vmem:[%s944 + $0x1] sm:$0xff]
      %v1183 = vld [vmem:[%s944 + $0x11] sm:$0xff]
      %v1184 = vld [vmem:[%s944 + $0x21] sm:$0xff]
      %v1185 = vld [vmem:[%s944 + $0x31] sm:$0xff]
      %v1186 = vld [vmem:[%s944 + $0x41] sm:$0xff]
      %v1187 = vld [vmem:[%s944 + $0x51] sm:$0xff]
      %v1188 = vld [vmem:[%s944 + $0x61] sm:$0xff]
      %v1189 = vld [vmem:[%s944 + $0x71] sm:$0xff]
      %v1190 = vpack.c.bf16 %v1183, %v1182
      %v1191 = vpack.c.bf16 %v1185, %v1184
      %v1192 = vpack.c.bf16 %v1187, %v1186
      %v1193 = vpack.c.bf16 %v1189, %v1188
      %v1194 = vld [vmem:[#allocation2] sm:$0xff]
      %v1195 = vld [vmem:[#allocation2 + $0x8] sm:$0xff]
      %v1196 = vld [vmem:[#allocation2 + $0x10] sm:$0xff]
      %v1197 = vld [vmem:[#allocation2 + $0x18] sm:$0xff]
      %v1198 = vld [vmem:[#allocation2 + $0x20] sm:$0xff]
      %v1199 = vld [vmem:[#allocation2 + $0x28] sm:$0xff]
      %v1200 = vld [vmem:[#allocation2 + $0x30] sm:$0xff]
      %v1201 = vld [vmem:[#allocation2 + $0x38] sm:$0xff]
      %s1202 = scalar_lea.vmem %s210, 16
      %v1203 = vld [vmem:[%s1202] sm:$0x3]
      %v1205 = vsel %vm253, %v1190, 0
      %v1208 = vsel %vm253, %v1191, 0
      %v1211 = vsel %vm253, %v1192, 0
      %v1214 = vsel %vm253, %v1193, 0
      %v1217 = vsel %vm266, %v1203, 0
      %1219 = vmatprep.subr.bf16.mxu0 0
      %1220 = vmatpush1.bf16.msra.mxu0 %v1217
      %1221 = vmatprep.subr.bf16.mxu0 0
      %1222 = vmatpush1.bf16.msra.mxu0 0
      %1223 = vmatprep.subr.bf16.mxu0 0
      %1224 = vmatpush1.bf16.msra.mxu0 0
      %1225 = vmatprep.subr.bf16.mxu0 0
      %1226 = vmatpush1.bf16.msra.mxu0 0
      %1227 = vmatprep.subr.bf16.mxu0 0
      %1228 = vmatpush1.bf16.msra.mxu0 0
      %1229 = vmatprep.subr.bf16.mxu0 0
      %1230 = vmatpush1.bf16.msra.mxu0 0
      %1231 = vmatprep.subr.bf16.mxu0 0
      %1232 = vmatpush1.bf16.msra.mxu0 0
      %1233 = vmatprep.subr.bf16.mxu0 0
      %1234 = vmatpush1.bf16.msra.mxu0 0
      %1235 = vmatprep.subr.bf16.mxu0 0
      %1236 = vmatpush1.bf16.msra.mxu0 0
      %1237 = vmatprep.subr.bf16.mxu0 0
      %1238 = vmatpush1.bf16.msra.mxu0 0
      %1239 = vmatprep.subr.bf16.mxu0 0
      %1240 = vmatpush1.bf16.msra.mxu0 0
      %1241 = vmatprep.subr.bf16.mxu0 0
      %1242 = vmatpush1.bf16.msra.mxu0 0
      %1243 = vmatprep.subr.bf16.mxu0 0
      %1244 = vmatpush1.bf16.msra.mxu0 0
      %1245 = vmatprep.subr.bf16.mxu0 0
      %1246 = vmatpush1.bf16.msra.mxu0 0
      %1247 = vmatprep.subr.bf16.mxu0 0
      %1248 = vmatpush1.bf16.msra.mxu0 0
      %1249 = vmatprep.subr.bf16.mxu0 0
      %1250 = vmatpush1.bf16.msra.mxu0 0
      %1251 = vmatprep.mubr.bf16.mxu0 0
      %1252 = vmatmul.mubr.bf16.gmra.mrb[0].mxu0 %v1205
      %v1253 = vpop.f32.mrb[0].mxu0
      %v1254 = vadd.f32 0.0, %v1253
      %v1255 = vpop.f32.mrb[0].mxu0
      %v1256 = vpop.f32.mrb[0].mxu0
      %v1257 = vadd.f32 0.0, %v1256
      %v1258 = vpop.f32.mrb[0].mxu0
      %1259 = vmatprep.mubr.bf16.mxu0 0
      %1260 = vmatmul.mubr.bf16.gmra.mrb[0].mxu0 %v1208
      %v1261 = vpop.f32.mrb[0].mxu0
      %v1262 = vadd.f32 0.0, %v1261
      %v1263 = vpop.f32.mrb[0].mxu0
      %v1264 = vpop.f32.mrb[0].mxu0
      %v1265 = vadd.f32 0.0, %v1264
      %v1266 = vpop.f32.mrb[0].mxu0
      %1267 = vmatprep.mubr.bf16.mxu0 0
      %1268 = vmatmul.mubr.bf16.gmra.mrb[0].mxu0 %v1211
      %v1269 = vpop.f32.mrb[0].mxu0
      %v1270 = vadd.f32 0.0, %v1269
      %v1271 = vpop.f32.mrb[0].mxu0
      %v1272 = vpop.f32.mrb[0].mxu0
      %v1273 = vadd.f32 0.0, %v1272
      %v1274 = vpop.f32.mrb[0].mxu0
      %1275 = vmatprep.mubr.bf16.mxu0 0
      %1276 = vmatmul.mubr.bf16.gmra.mrb[0].mxu0 %v1214
      %v1277 = vpop.f32.mrb[0].mxu0
      %v1278 = vadd.f32 0.0, %v1277
      %v1279 = vpop.f32.mrb[0].mxu0
      %v1280 = vpop.f32.mrb[0].mxu0
      %v1281 = vadd.f32 0.0, %v1280
      %v1282 = vpop.f32.mrb[0].mxu0
      %1283 = vdwg.mxu0
      %v1284 = vadd.f32 %v1194, %v1254
      %v1285 = vadd.f32 %v1195, %v1257
      %v1286 = vadd.f32 %v1196, %v1262
      %v1287 = vadd.f32 %v1197, %v1265
      %v1288 = vadd.f32 %v1198, %v1270
      %v1289 = vadd.f32 %v1199, %v1273
      %v1290 = vadd.f32 %v1200, %v1278
      %v1291 = vadd.f32 %v1201, %v1281
      %1292 = vst.msk [vmem:[#allocation2] sm:$0xff] %vm223, %v1284
      %1293 = vst.msk [vmem:[#allocation2 + $0x8] sm:$0xff] %vm223, %v1285
      %1294 = vst.msk [vmem:[#allocation2 + $0x10] sm:$0xff] %vm223, %v1286
      %1295 = vst.msk [vmem:[#allocation2 + $0x18] sm:$0xff] %vm223, %v1287
      %1296 = vst.msk [vmem:[#allocation2 + $0x20] sm:$0xff] %vm223, %v1288
      %1297 = vst.msk [vmem:[#allocation2 + $0x28] sm:$0xff] %vm223, %v1289
      %1298 = vst.msk [vmem:[#allocation2 + $0x30] sm:$0xff] %vm223, %v1290
      %1299 = vst.msk [vmem:[#allocation2 + $0x38] sm:$0xff] %vm223, %v1291
      %v1300 = vld [vmem:[#allocation2] sm:$0xff]
      %v1301 = vld [vmem:[#allocation2 + $0x8] sm:$0xff]
      %v1302 = vld [vmem:[#allocation2 + $0x10] sm:$0xff]
      %v1303 = vld [vmem:[#allocation2 + $0x18] sm:$0xff]
      %v1304 = vld [vmem:[#allocation2 + $0x20] sm:$0xff]
      %v1305 = vld [vmem:[#allocation2 + $0x28] sm:$0xff]
      %v1306 = vld [vmem:[#allocation2 + $0x30] sm:$0xff]
      %v1307 = vld [vmem:[#allocation2 + $0x38] sm:$0xff]
      %v1308 = vld [vmem:[%s213] sm:$0x1]
      %v1310 = vlaneseq
      %v1311 = vshrl.u32 %v1310, 7
      %v1312 = vsub.s32 0, %v1311
      %v1313 = vrot.slane %v1308, %v1312
      %v1315 = vadd.f32 %v1300, %v1313
      %v1316 = vadd.f32 %v1301, %v1313
      %v1317 = vadd.f32 %v1302, %v1313
      %v1318 = vadd.f32 %v1303, %v1313
      %v1319 = vadd.f32 %v1304, %v1313
      %v1320 = vadd.f32 %v1305, %v1313
      %v1321 = vadd.f32 %v1306, %v1313
      %v1322 = vadd.f32 %v1307, %v1313
      %vm1323 = vcmp.ge.f32.partialorder %v1315, 0.0
      %vm1324 = vcmp.ge.f32.partialorder %v1316, 0.0
      %vm1325 = vcmp.ge.f32.partialorder %v1317, 0.0
      %vm1326 = vcmp.ge.f32.partialorder %v1318, 0.0
      %vm1327 = vcmp.ge.f32.partialorder %v1319, 0.0
      %vm1328 = vcmp.ge.f32.partialorder %v1320, 0.0
      %vm1329 = vcmp.ge.f32.partialorder %v1321, 0.0
      %vm1330 = vcmp.ge.f32.partialorder %v1322, 0.0
      %v1331 = vmul.f32 %v1315, 0.01
      %v1332 = vmul.f32 %v1316, 0.01
      %v1333 = vmul.f32 %v1317, 0.01
      %v1334 = vmul.f32 %v1318, 0.01
      %v1335 = vmul.f32 %v1319, 0.01
      %v1336 = vmul.f32 %v1320, 0.01
      %v1337 = vmul.f32 %v1321, 0.01
      %v1338 = vmul.f32 %v1322, 0.01
      %v1339 = vsel %vm1323, %v1315, %v1331
      %v1340 = vsel %vm1324, %v1316, %v1332
      %v1341 = vsel %vm1325, %v1317, %v1333
      %v1342 = vsel %vm1326, %v1318, %v1334
      %v1343 = vsel %vm1327, %v1319, %v1335
      %v1344 = vsel %vm1328, %v1320, %v1336
      %v1345 = vsel %vm1329, %v1321, %v1337
      %v1346 = vsel %vm1330, %v1322, %v1338
      %v1347 = vpack.c.bf16 %v1340, %v1339
      %v1348 = vpack.c.bf16 %v1342, %v1341
      %v1349 = vpack.c.bf16 %v1344, %v1343
      %v1350 = vpack.c.bf16 %v1346, %v1345
      %v1355 = vunpack.c.l.b16 %v1347
      %v1356 = vunpack.c.h.b16 %v1347
      %v1357 = vunpack.c.l.b16 %v1348
      %v1358 = vunpack.c.h.b16 %v1348
      %v1359 = vunpack.c.l.b16 %v1349
      %v1360 = vunpack.c.h.b16 %v1349
      %v1361 = vunpack.c.l.b16 %v1350
      %v1362 = vunpack.c.h.b16 %v1350
      %v1363 = vpack.c.b16 %v1355, %v1355
      %v1364 = vpack.c.b16 %v1356, %v1356
      %v1365 = vpack.c.b16 %v1357, %v1357
      %v1366 = vpack.c.b16 %v1358, %v1358
      %v1367 = vpack.c.b16 %v1359, %v1359
      %v1368 = vpack.c.b16 %v1360, %v1360
      %v1369 = vpack.c.b16 %v1361, %v1361
      %v1370 = vpack.c.b16 %v1362, %v1362
      %vm1379 = vcmask 60416
      %1380 = vst.msk [vmem:[%s221] sm:$0xf] %vm1379, %v1363
      %1381 = vst.msk [vmem:[%s221 + $0x4] sm:$0xf] %vm1379, %v1364
      %1382 = vst.msk [vmem:[%s221 + $0x8] sm:$0xf] %vm1379, %v1365
      %1383 = vst.msk [vmem:[%s221 + $0xc] sm:$0xf] %vm1379, %v1366
      %1384 = vst.msk [vmem:[%s221 + $0x10] sm:$0xf] %vm1379, %v1367
      %1385 = vst.msk [vmem:[%s221 + $0x14] sm:$0xf] %vm1379, %v1368
      %1386 = vst.msk [vmem:[%s221 + $0x18] sm:$0xf] %vm1379, %v1369
      %1387 = vst.msk [vmem:[%s221 + $0x1c] sm:$0xf] %vm1379, %v1370
      %p1388 = scmp.lt.s32.totalorder %s18, 1
      %s1389 = scalar_select %p1388, %s18, 1
      %p1390 = scmp.lt.s32.totalorder %s19, 0
      %s1391 = scalar_select %p1390, %s19, 0
      %s1392 = smul.addr %s1389, 8
      %s1393 = sadd.s32 %s1391, %s1392
      %s1394 = smul.addr %s1393, 4
      %s1395 = scalar_lea.vmem %s3, %s1394
      // Predicated region
      $region33: #{gradual_style_block_forward.5} parent=31 // pred_check
        %p1396 = pneg %p124
      $region34: #{gradual_style_block_forward.5} parent=31 // pred_check_branch
        %1398 = sbr.rel (%p1396) target = $region36
      $region35: #{gradual_style_block_forward.5} parent=31 // pred_region
        _
      $region36: #{gradual_style_block_forward.5} parent=31 // pred_fallthru
        _
    $region32: #{gradual_style_block_forward.5} parent=5 // pred_fallthru
      _
    %p1399 = scmp.le.s32.totalorder 2, %s9
    // Predicated region
    $region37: #{gradual_style_block_forward.5} parent=5 // pred_check
      %p1400 = pneg %p1399
    $region38: #{gradual_style_block_forward.5} parent=5 // pred_check_branch
      %1402 = sbr.rel (%p1400) target = $region40
    $region39: #{gradual_style_block_forward.5} parent=5 // pred_region
      %s1403 = ssub.s32 %s9, 2
      // Predicated region
      $region41: #{gradual_style_block_forward.5} parent=39 // pred_check
        %p1404 = pneg %p130
      $region42: #{gradual_style_block_forward.5} parent=39 // pred_check_branch
        %1406 = sbr.rel (%p1404) target = $region44
      $region43: #{gradual_style_block_forward.5} parent=39 // pred_region
        %p1407 = scmp.lt.s32.totalorder %s20, 1
        %s1408 = scalar_select %p1407, %s20, 1
        %p1409 = scmp.lt.s32.totalorder %s21, 0
        %s1410 = scalar_select %p1409, %s21, 0
        %s1411 = smul.addr %s1408, 8
        %s1412 = sadd.s32 %s1410, %s1411
        %s1413 = smul.addr %s1412, 4
        %s1414 = scalar_lea.vmem %s3, %s1413
      $region44: #{gradual_style_block_forward.5} parent=39 // pred_fallthru
        _
    $region40: #{gradual_style_block_forward.5} parent=5 // pred_fallthru
      _
  $region6: #{gradual_style_block_forward.5} parent=0 // loop_footer
    %s13 = sadd.s32 1, %s9
  $region7: #{gradual_style_block_forward.5} parent=0 // loop_footer_branch
    %8 = sbr.rel target = $region3
  $region8: #{gradual_style_block_forward.5} parent=0 // loop_exit
    _

// kernel: gradual_style_block_forward.7
$region0: #{gradual_style_block_forward.7}
  #allocation0 [shape = 'u32[]', space=smem, size = 0x4, offset = 0x4, fixed_abs, tag = 'smem constant byte address 0x4 - core index']
  #allocation1 [shape = 'u32[144,128]{1,0:T(1,128)}', space=vmem, size = 0x12000, scoped, tag = 'internal scratch']
  #allocation2 [shape = 'f32[8,128]{1,0:T(8,128)}', space=vmem, size = 0x1000, scoped, tag = 'scratch operand']
  %s0 = inlined_call_operand.vmem [shape: bf16[8,128], index: 0, kind: input, shape index: {}]
  %s1 = inlined_call_operand.vmem [shape: bf16[128,128], index: 1, kind: input, shape index: {}]
  %s2 = inlined_call_operand.vmem [shape: f32[1,128], index: 2, kind: input, shape index: {}]
  %s3 = inlined_call_operand.vmem [shape: bf16[8,128], index: 3, kind: output, shape index: {}]
  %s4 = sld [smem:[#allocation0]]
  $region30: #{gradual_style_block_forward.7} parent=0
    _
  %s6 = ssub.s32 1, %s4
  %s7 = scalar_select 0, %s6, %s4
  // Predicated region
  $region2: #{gradual_style_block_forward.7} parent=0 // pred_check
    _
  $region3: #{gradual_style_block_forward.7} parent=0 // pred_check_branch
    %9 = sbr.rel (0) target = $region5
  $region4: #{gradual_style_block_forward.7} parent=0 // pred_region
    _
  $region5: #{gradual_style_block_forward.7} parent=0 // pred_fallthru
    _
  // Predicated region
  $region6: #{gradual_style_block_forward.7} parent=0 // pred_check
    _
  $region7: #{gradual_style_block_forward.7} parent=0 // pred_check_branch
    %11 = sbr.rel (0) target = $region9
  $region8: #{gradual_style_block_forward.7} parent=0 // pred_region
    _
  $region9: #{gradual_style_block_forward.7} parent=0 // pred_fallthru
    _
  // Predicated region
  $region10: #{gradual_style_block_forward.7} parent=0 // pred_check
    _
  $region11: #{gradual_style_block_forward.7} parent=0 // pred_check_branch
    %13 = sbr.rel (0) target = $region13
  $region12: #{gradual_style_block_forward.7} parent=0 // pred_region
    _
  $region13: #{gradual_style_block_forward.7} parent=0 // pred_fallthru
    _
  %p15 = scmp.eq.s32.totalorder 0, 0
  // Predicated region
  $region14: #{gradual_style_block_forward.7} parent=0 // pred_check
    %p16 = pneg %p15
  $region15: #{gradual_style_block_forward.7} parent=0 // pred_check_branch
    %18 = sbr.rel (%p16) target = $region17
  $region16: #{gradual_style_block_forward.7} parent=0 // pred_region
    %19 = vst [vmem:[#allocation2] sm:$0xff] 0.0
  $region17: #{gradual_style_block_forward.7} parent=0 // pred_fallthru
    _
  %v20 = vld [vmem:[#allocation2] sm:$0xff]
  %v21 = vld [vmem:[%s0] sm:$0xf]
  %v22 = vld [vmem:[%s1] sm:$0xf]
  %v23 = vld [vmem:[%s1 + $0x4] sm:$0xf]
  %v24 = vld [vmem:[%s1 + $0x8] sm:$0xf]
  %v25 = vld [vmem:[%s1 + $0xc] sm:$0xf]
  %v26 = vld [vmem:[%s1 + $0x10] sm:$0xf]
  %v27 = vld [vmem:[%s1 + $0x14] sm:$0xf]
  %v28 = vld [vmem:[%s1 + $0x18] sm:$0xf]
  %v29 = vld [vmem:[%s1 + $0x1c] sm:$0xf]
  %v30 = vld [vmem:[%s1 + $0x20] sm:$0xf]
  %v31 = vld [vmem:[%s1 + $0x24] sm:$0xf]
  %v32 = vld [vmem:[%s1 + $0x28] sm:$0xf]
  %v33 = vld [vmem:[%s1 + $0x2c] sm:$0xf]
  %v34 = vld [vmem:[%s1 + $0x30] sm:$0xf]
  %v35 = vld [vmem:[%s1 + $0x34] sm:$0xf]
  %v36 = vld [vmem:[%s1 + $0x38] sm:$0xf]
  %v37 = vld [vmem:[%s1 + $0x3c] sm:$0xf]
  %v54 = vunpack.c.l.b16 %v22
  %v55 = vunpack.c.l.b16 %v23
  %v56 = vunpack.c.l.b16 %v24
  %v57 = vunpack.c.l.b16 %v25
  %v58 = vunpack.c.l.b16 %v26
  %v59 = vunpack.c.l.b16 %v27
  %v60 = vunpack.c.l.b16 %v28
  %v61 = vunpack.c.l.b16 %v29
  %v62 = vunpack.c.l.b16 %v30
  %v63 = vunpack.c.l.b16 %v31
  %v64 = vunpack.c.l.b16 %v32
  %v65 = vunpack.c.l.b16 %v33
  %v66 = vunpack.c.l.b16 %v34
  %v67 = vunpack.c.l.b16 %v35
  %v68 = vunpack.c.l.b16 %v36
  %v69 = vunpack.c.l.b16 %v37
  %v70 = vpack.c.b16 %v55, %v54
  %v71 = vpack.c.b16 %v57, %v56
  %v72 = vpack.c.b16 %v59, %v58
  %v73 = vpack.c.b16 %v61, %v60
  %v74 = vpack.c.b16 %v63, %v62
  %v75 = vpack.c.b16 %v65, %v64
  %v76 = vpack.c.b16 %v67, %v66
  %v77 = vpack.c.b16 %v69, %v68
  %86 = vmatprep.subr.bf16.mxu0 0
  %87 = vmatpush1.bf16.msra.mxu0 %v70
  %88 = vmatprep.subr.bf16.mxu0 0
  %89 = vmatpush1.bf16.msra.mxu0 %v71
  %90 = vmatprep.subr.bf16.mxu0 0
  %91 = vmatpush1.bf16.msra.mxu0 %v72
  %92 = vmatprep.subr.bf16.mxu0 0
  %93 = vmatpush1.bf16.msra.mxu0 %v73
  %94 = vmatprep.subr.bf16.mxu0 0
  %95 = vmatpush1.bf16.msra.mxu0 %v74
  %96 = vmatprep.subr.bf16.mxu0 0
  %97 = vmatpush1.bf16.msra.mxu0 %v75
  %98 = vmatprep.subr.bf16.mxu0 0
  %99 = vmatpush1.bf16.msra.mxu0 %v76
  %100 = vmatprep.subr.bf16.mxu0 0
  %101 = vmatpush1.bf16.msra.mxu0 %v77
  %102 = vmatprep.subr.bf16.mxu0 0
  %103 = vmatpush1.bf16.msra.mxu0 0
  %104 = vmatprep.subr.bf16.mxu0 0
  %105 = vmatpush1.bf16.msra.mxu0 0
  %106 = vmatprep.subr.bf16.mxu0 0
  %107 = vmatpush1.bf16.msra.mxu0 0
  %108 = vmatprep.subr.bf16.mxu0 0
  %109 = vmatpush1.bf16.msra.mxu0 0
  %110 = vmatprep.subr.bf16.mxu0 0
  %111 = vmatpush1.bf16.msra.mxu0 0
  %112 = vmatprep.subr.bf16.mxu0 0
  %113 = vmatpush1.bf16.msra.mxu0 0
  %114 = vmatprep.subr.bf16.mxu0 0
  %115 = vmatpush1.bf16.msra.mxu0 0
  %116 = vmatprep.subr.bf16.mxu0 0
  %117 = vmatpush1.bf16.msra.mxu0 0
  %118 = vmatprep.mubr.bf16.mxu0 0
  %119 = vmatmul.mubr.bf16.gmra.mrb[0].mxu0 %v21
  %v120 = vpop.f32.mrb[0].mxu0
  %v121 = vadd.f32 0.0, %v120
  %v122 = vpop.f32.mrb[0].mxu0
  %v123 = vpop.f32.mrb[0].mxu0
  %v124 = vpop.f32.mrb[0].mxu0
  %125 = vdwg.mxu0
  %v126 = vadd.f32 %v20, %v121
  %127 = vst [vmem:[#allocation2] sm:$0xff] %v126
  // Predicated region
  $region18: #{gradual_style_block_forward.7} parent=0 // pred_check
    %p128 = pneg %p15
  $region19: #{gradual_style_block_forward.7} parent=0 // pred_check_branch
    %130 = sbr.rel (%p128) target = $region21
  $region20: #{gradual_style_block_forward.7} parent=0 // pred_region
    %v131 = vld [vmem:[#allocation2] sm:$0xff]
    %v132 = vld [vmem:[%s2] sm:$0x1]
    %v134 = vlaneseq
    %v135 = vshrl.u32 %v134, 7
    %v136 = vsub.s32 0, %v135
    %v137 = vrot.slane %v132, %v136
    %v139 = vadd.f32 %v131, %v137
    %vm140 = vcmp.ge.f32.partialorder %v139, 0.0
    %v141 = vmul.f32 %v139, 0.01
    %v142 = vsel %vm140, %v139, %v141
    %v143 = vpack.c.bf16 %v142, %v142
    %144 = vst [vmem:[%s3] sm:$0xf] %v143
  $region21: #{gradual_style_block_forward.7} parent=0 // pred_fallthru
    _
  // Predicated region
  $region22: #{gradual_style_block_forward.7} parent=0 // pred_check
    _
  $region23: #{gradual_style_block_forward.7} parent=0 // pred_check_branch
    %146 = sbr.rel (0) target = $region25
  $region24: #{gradual_style_block_forward.7} parent=0 // pred_region
    _
  $region25: #{gradual_style_block_forward.7} parent=0 // pred_fallthru
    _
  // Predicated region
  $region26: #{gradual_style_block_forward.7} parent=0 // pred_check
    _
  $region27: #{gradual_style_block_forward.7} parent=0 // pred_check_branch
    %148 = sbr.rel (0) target = $region29
  $region28: #{gradual_style_block_forward.7} parent=0 // pred_region
    _
  $region29: #{gradual_style_block_forward.7} parent=0 // pred_fallthru
    _

// kernel: gradual_style_block_forward.9
$region0: #{gradual_style_block_forward.9}
  #allocation0 [shape = 'u32[]', space=smem, size = 0x4, offset = 0x4, fixed_abs, tag = 'smem constant byte address 0x4 - core index']
  #allocation1 [shape = 'u32[144,128]{1,0:T(1,128)}', space=vmem, size = 0x12000, scoped, tag = 'internal scratch']
  #allocation2 [shape = 'f32[8,128]{1,0:T(8,128)}', space=vmem, size = 0x1000, scoped, tag = 'scratch operand']
  %s0 = inlined_call_operand.vmem [shape: bf16[8,128], index: 0, kind: input, shape index: {}]
  %s1 = inlined_call_operand.vmem [shape: bf16[128,128], index: 1, kind: input, shape index: {}]
  %s2 = inlined_call_operand.vmem [shape: f32[1,128], index: 2, kind: input, shape index: {}]
  %s3 = inlined_call_operand.vmem [shape: f32[8,128], index: 3, kind: output, shape index: {}]
  %s4 = sld [smem:[#allocation0]]
  $region30: #{gradual_style_block_forward.9} parent=0
    _
  %s6 = ssub.s32 1, %s4
  %s7 = scalar_select 0, %s6, %s4
  // Predicated region
  $region2: #{gradual_style_block_forward.9} parent=0 // pred_check
    _
  $region3: #{gradual_style_block_forward.9} parent=0 // pred_check_branch
    %9 = sbr.rel (0) target = $region5
  $region4: #{gradual_style_block_forward.9} parent=0 // pred_region
    _
  $region5: #{gradual_style_block_forward.9} parent=0 // pred_fallthru
    _
  // Predicated region
  $region6: #{gradual_style_block_forward.9} parent=0 // pred_check
    _
  $region7: #{gradual_style_block_forward.9} parent=0 // pred_check_branch
    %11 = sbr.rel (0) target = $region9
  $region8: #{gradual_style_block_forward.9} parent=0 // pred_region
    _
  $region9: #{gradual_style_block_forward.9} parent=0 // pred_fallthru
    _
  // Predicated region
  $region10: #{gradual_style_block_forward.9} parent=0 // pred_check
    _
  $region11: #{gradual_style_block_forward.9} parent=0 // pred_check_branch
    %13 = sbr.rel (0) target = $region13
  $region12: #{gradual_style_block_forward.9} parent=0 // pred_region
    _
  $region13: #{gradual_style_block_forward.9} parent=0 // pred_fallthru
    _
  %p15 = scmp.eq.s32.totalorder 0, 0
  // Predicated region
  $region14: #{gradual_style_block_forward.9} parent=0 // pred_check
    %p16 = pneg %p15
  $region15: #{gradual_style_block_forward.9} parent=0 // pred_check_branch
    %18 = sbr.rel (%p16) target = $region17
  $region16: #{gradual_style_block_forward.9} parent=0 // pred_region
    %19 = vst [vmem:[#allocation2] sm:$0xff] 0.0
  $region17: #{gradual_style_block_forward.9} parent=0 // pred_fallthru
    _
  %v20 = vld [vmem:[#allocation2] sm:$0xff]
  %v21 = vld [vmem:[%s0] sm:$0xf]
  %v22 = vld [vmem:[%s1] sm:$0xf]
  %v23 = vld [vmem:[%s1 + $0x4] sm:$0xf]
  %v24 = vld [vmem:[%s1 + $0x8] sm:$0xf]
  %v25 = vld [vmem:[%s1 + $0xc] sm:$0xf]
  %v26 = vld [vmem:[%s1 + $0x10] sm:$0xf]
  %v27 = vld [vmem:[%s1 + $0x14] sm:$0xf]
  %v28 = vld [vmem:[%s1 + $0x18] sm:$0xf]
  %v29 = vld [vmem:[%s1 + $0x1c] sm:$0xf]
  %v30 = vld [vmem:[%s1 + $0x20] sm:$0xf]
  %v31 = vld [vmem:[%s1 + $0x24] sm:$0xf]
  %v32 = vld [vmem:[%s1 + $0x28] sm:$0xf]
  %v33 = vld [vmem:[%s1 + $0x2c] sm:$0xf]
  %v34 = vld [vmem:[%s1 + $0x30] sm:$0xf]
  %v35 = vld [vmem:[%s1 + $0x34] sm:$0xf]
  %v36 = vld [vmem:[%s1 + $0x38] sm:$0xf]
  %v37 = vld [vmem:[%s1 + $0x3c] sm:$0xf]
  %v54 = vunpack.c.l.b16 %v22
  %v55 = vunpack.c.l.b16 %v23
  %v56 = vunpack.c.l.b16 %v24
  %v57 = vunpack.c.l.b16 %v25
  %v58 = vunpack.c.l.b16 %v26
  %v59 = vunpack.c.l.b16 %v27
  %v60 = vunpack.c.l.b16 %v28
  %v61 = vunpack.c.l.b16 %v29
  %v62 = vunpack.c.l.b16 %v30
  %v63 = vunpack.c.l.b16 %v31
  %v64 = vunpack.c.l.b16 %v32
  %v65 = vunpack.c.l.b16 %v33
  %v66 = vunpack.c.l.b16 %v34
  %v67 = vunpack.c.l.b16 %v35
  %v68 = vunpack.c.l.b16 %v36
  %v69 = vunpack.c.l.b16 %v37
  %v70 = vpack.c.b16 %v55, %v54
  %v71 = vpack.c.b16 %v57, %v56
  %v72 = vpack.c.b16 %v59, %v58
  %v73 = vpack.c.b16 %v61, %v60
  %v74 = vpack.c.b16 %v63, %v62
  %v75 = vpack.c.b16 %v65, %v64
  %v76 = vpack.c.b16 %v67, %v66
  %v77 = vpack.c.b16 %v69, %v68
  %86 = vmatprep.subr.bf16.mxu0 0
  %87 = vmatpush1.bf16.msra.mxu0 %v70
  %88 = vmatprep.subr.bf16.mxu0 0
  %89 = vmatpush1.bf16.msra.mxu0 %v71
  %90 = vmatprep.subr.bf16.mxu0 0
  %91 = vmatpush1.bf16.msra.mxu0 %v72
  %92 = vmatprep.subr.bf16.mxu0 0
  %93 = vmatpush1.bf16.msra.mxu0 %v73
  %94 = vmatprep.subr.bf16.mxu0 0
  %95 = vmatpush1.bf16.msra.mxu0 %v74
  %96 = vmatprep.subr.bf16.mxu0 0
  %97 = vmatpush1.bf16.msra.mxu0 %v75
  %98 = vmatprep.subr.bf16.mxu0 0
  %99 = vmatpush1.bf16.msra.mxu0 %v76
  %100 = vmatprep.subr.bf16.mxu0 0
  %101 = vmatpush1.bf16.msra.mxu0 %v77
  %102 = vmatprep.subr.bf16.mxu0 0
  %103 = vmatpush1.bf16.msra.mxu0 0
  %104 = vmatprep.subr.bf16.mxu0 0
  %105 = vmatpush1.bf16.msra.mxu0 0
  %106 = vmatprep.subr.bf16.mxu0 0
  %107 = vmatpush1.bf16.msra.mxu0 0
  %108 = vmatprep.subr.bf16.mxu0 0
  %109 = vmatpush1.bf16.msra.mxu0 0
  %110 = vmatprep.subr.bf16.mxu0 0
  %111 = vmatpush1.bf16.msra.mxu0 0
  %112 = vmatprep.subr.bf16.mxu0 0
  %113 = vmatpush1.bf16.msra.mxu0 0
  %114 = vmatprep.subr.bf16.mxu0 0
  %115 = vmatpush1.bf16.msra.mxu0 0
  %116 = vmatprep.subr.bf16.mxu0 0
  %117 = vmatpush1.bf16.msra.mxu0 0
  %118 = vmatprep.mubr.bf16.mxu0 0
  %119 = vmatmul.mubr.bf16.gmra.mrb[0].mxu0 %v21
  %v120 = vpop.f32.mrb[0].mxu0
  %v121 = vadd.f32 0.0, %v120
  %v122 = vpop.f32.mrb[0].mxu0
  %v123 = vpop.f32.mrb[0].mxu0
  %v124 = vpop.f32.mrb[0].mxu0
  %125 = vdwg.mxu0
  %v126 = vadd.f32 %v20, %v121
  %127 = vst [vmem:[#allocation2] sm:$0xff] %v126
  // Predicated region
  $region18: #{gradual_style_block_forward.9} parent=0 // pred_check
    %p128 = pneg %p15
  $region19: #{gradual_style_block_forward.9} parent=0 // pred_check_branch
    %130 = sbr.rel (%p128) target = $region21
  $region20: #{gradual_style_block_forward.9} parent=0 // pred_region
    %v131 = vld [vmem:[#allocation2] sm:$0xff]
    %v132 = vld [vmem:[%s2] sm:$0x1]
    %v134 = vlaneseq
    %v135 = vshrl.u32 %v134, 7
    %v136 = vsub.s32 0, %v135
    %v137 = vrot.slane %v132, %v136
    %v139 = vadd.f32 %v131, %v137
    %140 = vst [vmem:[%s3] sm:$0xff] %v139
  $region21: #{gradual_style_block_forward.9} parent=0 // pred_fallthru
    _
  // Predicated region
  $region22: #{gradual_style_block_forward.9} parent=0 // pred_check
    _
  $region23: #{gradual_style_block_forward.9} parent=0 // pred_check_branch
    %142 = sbr.rel (0) target = $region25
  $region24: #{gradual_style_block_forward.9} parent=0 // pred_region
    _
  $region25: #{gradual_style_block_forward.9} parent=0 // pred_fallthru
    _
  // Predicated region
  $region26: #{gradual_style_block_forward.9} parent=0 // pred_check
    _
  $region27: #{gradual_style_block_forward.9} parent=0 // pred_check_branch
    %144 = sbr.rel (0) target = $region29
  $region28: #{gradual_style_block_forward.9} parent=0 // pred_region
    _
  $region29: #{gradual_style_block_forward.9} parent=0 // pred_fallthru
    _

</llo_original>
